<compile_context>
chip_gen: v6e
topology: v6e:2x2x1
jax: 0.10.0
libtpu: 0.0.40
codegen_flags: <defaults>
</compile_context>

<pallas_src>
import functools
import math

import jax
import jax.numpy as jnp
from jax import lax
from jax.experimental import pallas as pl
from jax.experimental.pallas import tpu as pltpu

_MIB = 1024 * 1024
_SINGLE_BUFFER_WEIGHTS = True  # may be flipped off by the fallback in __main__


def _vmem_limit_bytes():
    # v5e/v6e have 128 MiB VMEM per TensorCore, v7x only 64 MiB. Ask for a big
    # scoped-VMEM budget on the large chips so row tiles can grow, but stay
    # well under the physical ceiling on v7x.
    try:
        cap = pltpu.get_tpu_info().vmem_capacity_bytes
    except Exception:
        cap = 128 * _MIB
    return 48 * _MIB if cap <= 64 * _MIB else 96 * _MIB


def _compiler_params():
    return pltpu.CompilerParams(
        dimension_semantics=("parallel",),
        vmem_limit_bytes=_vmem_limit_bytes(),
    )


def _const_spec(block_shape, index_map):
    """BlockSpec for weights/biases with a constant index_map.

    These blocks are fetched once, so request a single VMEM buffer instead of
    the default double buffer (frees VMEM headroom, esp. on v7x).
    """
    if _SINGLE_BUFFER_WEIGHTS:
        try:
            return pl.BlockSpec(block_shape, index_map,
                                pipeline_mode=pl.Buffered(1))
        except Exception:
            pass
    return pl.BlockSpec(block_shape, index_map)


def _round_up(x, m):
    return ((x + m - 1) // m) * m


def _pick_row_tile(n, max_rows=512):
    """Row tile for [rows, D] kernels; caller pads rows up to a tile multiple."""
    if n <= max_rows:
        return _round_up(max(n, 8), 8)
    return max_rows


# ----------------------------------------------------------------------------
# Kernel A: fused attention block (one batch element per grid step)
#   packed QKV proj -> per-head softmax attention -> single full-depth
#   out-projection -> residual -> LayerNorm1
# ----------------------------------------------------------------------------
def _attn_block_kernel(x_ref, wqkv_ref, bqkv_ref, wo_ref, bo_ref, g_ref, b_ref,
                       *out_and_scratch, n_heads, scale, output_attention):
    if output_attention:
        o_ref, a_ref, ctx_ref = out_and_scratch
    else:
        o_ref, ctx_ref = out_and_scratch
        a_ref = None

    # TODO(synk): attn_mask is None in this instantiation (FullAttention with
    # mask_flag=False); the masking path is not implemented.
    x = x_ref[0]                                   # [L, D] f32 residual stream
    L, D = x.shape
    dh = D // n_heads

    # Packed QKV projection on the MXU; weights are already bf16 in HBM.
    qkv = (
        jnp.dot(x.astype(jnp.bfloat16), wqkv_ref[...],
                preferred_element_type=jnp.float32)
        + bqkv_ref[...]
    )                                              # [L, 3D] f32

    # Heads are split in-kernel; per-head contexts are staged into a VMEM
    # scratch so the out-projection below is ONE [L,D]@[D,D] matmul
    # (full MXU contraction depth) instead of H shallow [L,dh]@[dh,D].
    # TODO(synk): head slices at dh offsets are not 128-lane aligned for
    # dh<128; a lane-padded Wqkv layout would avoid the extra shuffles on v6e.
    for h in range(n_heads):                       # static loop, few heads
        lo = h * dh
        qh = qkv[:, lo:lo + dh].astype(jnp.bfloat16)            # [L, dh]
        kh = qkv[:, D + lo:D + lo + dh].astype(jnp.bfloat16)    # [L, dh]
        vh = qkv[:, 2 * D + lo:2 * D + lo + dh].astype(jnp.bfloat16)

        # scores: contract head dims directly (no materialized k.T)
        s = lax.dot_general(qh, kh, (((1,), (1,)), ((), ())),
                            preferred_element_type=jnp.float32) * scale
        s = s - jnp.max(s, axis=-1, keepdims=True)
        p = jnp.exp(s)
        # exact reciprocal (approx=False) so rows sum to 1 like torch.softmax
        p = p * pl.reciprocal(jnp.sum(p, axis=-1, keepdims=True))
        if a_ref is not None:
            a_ref[0, h] = p.astype(a_ref.dtype)    # output_attention=True

        ctx_ref[:, lo:lo + dh] = jnp.dot(p.astype(jnp.bfloat16), vh,
                                         preferred_element_type=jnp.float32)

    # Single full-depth out-projection (== concat(ctx_h) @ Wo).
    new_x = jnp.dot(ctx_ref[...].astype(jnp.bfloat16), wo_ref[...],
                    preferred_element_type=jnp.float32) + bo_ref[...]
    z = x + new_x                                  # dropout = identity (eval)

    # LayerNorm1 (biased variance, eps=1e-5, matching nn.LayerNorm)
    mu = jnp.mean(z, axis=-1, keepdims=True)
    var = jnp.mean((z - mu) * (z - mu), axis=-1, keepdims=True)
    o_ref[0] = (z - mu) * lax.rsqrt(var + 1e-5) * g_ref[...] + b_ref[...]


def attention_block(x, p, n_heads, attn_dtype=jnp.bfloat16,
                    output_attention=True):
    B, L, D = x.shape
    scale = 1.0 / math.sqrt(D // n_heads)
    kernel = functools.partial(_attn_block_kernel, n_heads=n_heads, scale=scale,
                               output_attention=output_attention)

    if output_attention:
        out_shape = (jax.ShapeDtypeStruct((B, L, D), jnp.float32),
                     jax.ShapeDtypeStruct((B, n_heads, L, L), attn_dtype))
        out_specs = (pl.BlockSpec((1, L, D), lambda b: (b, 0, 0)),
                     pl.BlockSpec((1, n_heads, L, L), lambda b: (b, 0, 0, 0)))
    else:
        out_shape = jax.ShapeDtypeStruct((B, L, D), jnp.float32)
        out_specs = pl.BlockSpec((1, L, D), lambda b: (b, 0, 0))

    res = pl.pallas_call(
        kernel,
        grid=(B,),
        out_shape=out_shape,
        in_specs=[
            pl.BlockSpec((1, L, D), lambda b: (b, 0, 0)),       # x (lane dim D)
            _const_spec((D, 3 * D), lambda b: (0, 0)),          # packed Wqkv bf16
            _const_spec((1, 3 * D), lambda b: (0, 0)),          # bqkv
            _const_spec((D, D), lambda b: (0, 0)),              # Wo bf16
            _const_spec((1, D), lambda b: (0, 0)),              # bo
            _const_spec((1, D), lambda b: (0, 0)),              # LN1 gamma
            _const_spec((1, D), lambda b: (0, 0)),              # LN1 beta
        ],
        out_specs=out_specs,
        scratch_shapes=[pltpu.VMEM((L, D), jnp.float32)],       # ctx staging
        compiler_params=_compiler_params(),
    )(x, p["wqkv"], p["bqkv"], p["wo"], p["bo"], p["g1"], p["be1"])

    if output_attention:
        return res[0], res[1]
    return res, None


# ----------------------------------------------------------------------------
# Kernel B: fused FFN block (conv1(k=1) -> relu -> conv2(k=1)) -> residual
#           -> LayerNorm2, optionally followed by the fused final encoder LN.
# ----------------------------------------------------------------------------
def _ffn_ln_kernel(x_ref, w1_ref, b1_ref, w2_ref, b2_ref, g_ref, b_ref,
                   *rest, final_ln):
    if final_ln:
        gf_ref, bf_ref, o_ref = rest
    else:
        (o_ref,) = rest

    x = x_ref[...]                                               # [tile, D] f32
    h = (jnp.dot(x.astype(jnp.bfloat16), w1_ref[...],
                 preferred_element_type=jnp.float32) + b1_ref[...])
    h = jnp.maximum(h, 0.0)                                      # relu
    y = (jnp.dot(h.astype(jnp.bfloat16), w2_ref[...],
                 preferred_element_type=jnp.float32) + b2_ref[...])
    z = x + y                                                    # residual

    mu = jnp.mean(z, axis=-1, keepdims=True)
    var = jnp.mean((z - mu) * (z - mu), axis=-1, keepdims=True)
    z = (z - mu) * lax.rsqrt(var + 1e-5) * g_ref[...] + b_ref[...]

    if final_ln:                                                 # Encoder.norm fused in
        mu = jnp.mean(z, axis=-1, keepdims=True)
        var = jnp.mean((z - mu) * (z - mu), axis=-1, keepdims=True)
        z = (z - mu) * lax.rsqrt(var + 1e-5) * gf_ref[...] + bf_ref[...]

    o_ref[...] = z


def ffn_block(x2d, p, final_ln_params=None):
    n, d = x2d.shape
    dff = p["w_ff1"].shape[1]
    tile = _pick_row_tile(n)
    n_pad = _round_up(n, tile)
    if n_pad != n:
        x2d = jnp.pad(x2d, ((0, n_pad - n), (0, 0)))             # padded rows are discarded

    final_ln = final_ln_params is not None
    kernel = functools.partial(_ffn_ln_kernel, final_ln=final_ln)

    in_specs = [
        pl.BlockSpec((tile, d), lambda i: (i, 0)),
        _const_spec((d, dff), lambda i: (0, 0)),                 # W_ff1 bf16
        _const_spec((1, dff), lambda i: (0, 0)),
        _const_spec((dff, d), lambda i: (0, 0)),                 # W_ff2 bf16
        _const_spec((1, d), lambda i: (0, 0)),
        _const_spec((1, d), lambda i: (0, 0)),                   # LN2 gamma
        _const_spec((1, d), lambda i: (0, 0)),                   # LN2 beta
    ]
    args = [x2d, p["w_ff1"], p["b_ff1"], p["w_ff2"], p["b_ff2"],
            p["g2"], p["be2"]]
    if final_ln:
        in_specs += [_const_spec((1, d), lambda i: (0, 0)),      # final LN gamma
                     _const_spec((1, d), lambda i: (0, 0))]      # final LN beta
        args += [final_ln_params[0], final_ln_params[1]]

    out = pl.pallas_call(
        kernel,
        grid=(n_pad // tile,),
        out_shape=jax.ShapeDtypeStruct((n_pad, d), jnp.float32),
        in_specs=in_specs,
        out_specs=pl.BlockSpec((tile, d), lambda i: (i, 0)),
        compiler_params=_compiler_params(),
    )(*args)
    return out[:n]


# ----------------------------------------------------------------------------
# Standalone LayerNorm kernel (only used for the degenerate no-attn-layer case)
# ----------------------------------------------------------------------------
def _ln_kernel(x_ref, g_ref, b_ref, o_ref):
    z = x_ref[...]
    mu = jnp.mean(z, axis=-1, keepdims=True)
    var = jnp.mean((z - mu) * (z - mu), axis=-1, keepdims=True)
    o_ref[...] = (z - mu) * lax.rsqrt(var + 1e-5) * g_ref[...] + b_ref[...]


def layernorm(x2d, gamma, beta):
    n, d = x2d.shape
    tile = _pick_row_tile(n)
    n_pad = _round_up(n, tile)
    if n_pad != n:
        x2d = jnp.pad(x2d, ((0, n_pad - n), (0, 0)))
    out = pl.pallas_call(
        _ln_kernel,
        grid=(n_pad // tile,),
        out_shape=jax.ShapeDtypeStruct((n_pad, d), jnp.float32),
        in_specs=[pl.BlockSpec((tile, d), lambda i: (i, 0)),
                  _const_spec((1, d), lambda i: (0, 0)),
                  _const_spec((1, d), lambda i: (0, 0))],
        out_specs=pl.BlockSpec((tile, d), lambda i: (i, 0)),
        compiler_params=_compiler_params(),
    )(x2d, gamma, beta)
    return out[:n]


# ----------------------------------------------------------------------------
# Encoder glue (plain JAX: only reshapes / residual wiring)
# ----------------------------------------------------------------------------
def encoder_fwd(x, params, attn_dtype=jnp.bfloat16, output_attention=True):
    # Encoder.forward with conv_layers=None, norm_layer=LayerNorm(d_model).
    # The final LayerNorm is fused into the last layer's FFN kernel.
    attns = []
    layers = params["layers"]
    B, L, D = x.shape
    for i, p in enumerate(layers):
        last = i == len(layers) - 1
        final_ln = (params["g_norm"], params["b_norm"]) if last else None
        # x1 = norm1(x + AttentionLayer(x))         (fused kernel A)
        x1, attn = attention_block(x, p, params["n_heads"], attn_dtype,
                                   output_attention)
        # out = norm2(x1 + FFN(x1)) [+ final norm]  (fused kernel B)
        x = ffn_block(x1.reshape(B * L, D), p, final_ln).reshape(B, L, D)
        attns.append(attn)
    if not layers:  # degenerate: container with only the norm layer
        x = layernorm(x.reshape(B * L, D), params["g_norm"],
                      params["b_norm"]).reshape(B, L, D)
    return x, attns


# ----------------------------------------------------------------------------
# Deterministic parameter init (Q/K/V packed into one [D, 3D] weight).
# Matmul weights are stored in HBM as bf16 (cast once here) so the kernels
# never re-cast them per grid step.
# ----------------------------------------------------------------------------
def init_params(key, d_model, n_heads, d_ff, n_layers):
    def w(k, shape, dtype=jnp.bfloat16):
        return (jax.random.normal(k, shape, dtype=jnp.float32) * 0.1).astype(dtype)

    layers = []
    for l in range(n_layers):
        ks = jax.random.split(jax.random.fold_in(key, l), 8)
        layers.append(
            {
                "wqkv": w(ks[0], (d_model, 3 * d_model)),
                "bqkv": jnp.zeros((1, 3 * d_model), jnp.float32),
                "wo": w(ks[1], (d_model, d_model)),
                "bo": jnp.zeros((1, d_model), jnp.float32),
                "w_ff1": w(ks[2], (d_model, d_ff)),
                "b_ff1": w(ks[3], (1, d_ff), jnp.float32),
                "w_ff2": w(ks[4], (d_ff, d_model)),
                "b_ff2": w(ks[5], (1, d_model), jnp.float32),
                "g1": jnp.ones((1, d_model), jnp.float32),
                "be1": jnp.zeros((1, d_model), jnp.float32),
                "g2": jnp.ones((1, d_model), jnp.float32),
                "be2": jnp.zeros((1, d_model), jnp.float32),
            }
        )
    return {
        "layers": layers,
        "n_heads": n_heads,
        "g_norm": jnp.ones((1, d_model), jnp.float32),
        "b_norm": jnp.zeros((1, d_model), jnp.float32),
    }


# ----------------------------------------------------------------------------
if __name__ == "__main__":
    B, L, D = 2, 8, 32
    n_heads, d_ff, n_layers = 4, 64, 2

    key = jax.random.PRNGKey(0)
    k_x, k_p = jax.random.split(key)
    x = jax.random.normal(k_x, (B, L, D), dtype=jnp.float32)
    params = init_params(k_p, D, n_heads, d_ff, n_layers)

    try:
        out, attns = encoder_fwd(x, params)
        out = jax.block_until_ready(out)
    except Exception:
        # Fallback: if this Pallas build rejects single-buffered weight specs,
        # retry with default double-buffering (correctness unaffected).
        _SINGLE_BUFFER_WEIGHTS = False
        out, attns = encoder_fwd(x, params)
        out = jax.block_until_ready(out)

    attns = [jax.block_until_ready(a) for a in attns]

    assert out.shape == (B, L, D)
    assert bool(jnp.all(jnp.isfinite(out)))
    assert len(attns) == n_layers
    assert all(a.shape == (B, n_heads, L, L) for a in attns)
    print("KERNEL_OK")
</pallas_src>

<mosaic_0001>
module attributes {stable_mosaic.version = 11 : i64} {
  func.func @_attn_block_kernel(%arg0: i32, %arg1: memref<1x8x32xf32, #tpu.memory_space<vmem>>, %arg2: memref<32x96xbf16, #tpu.memory_space<vmem>>, %arg3: memref<1x96xf32, #tpu.memory_space<vmem>>, %arg4: memref<32x32xbf16, #tpu.memory_space<vmem>>, %arg5: memref<1x32xf32, #tpu.memory_space<vmem>>, %arg6: memref<1x32xf32, #tpu.memory_space<vmem>>, %arg7: memref<1x32xf32, #tpu.memory_space<vmem>>, %arg8: memref<1x8x32xf32, #tpu.memory_space<vmem>>, %arg9: memref<1x4x8x8xbf16, #tpu.memory_space<vmem>>, %arg10: memref<8x32xf32, #tpu.memory_space<vmem>>) attributes {dimension_semantics = [#tpu.dimension_semantics<parallel>], iteration_bounds = array<i64: 2>, scalar_prefetch = 0 : i64, scratch_operands = 1 : i64, tpu.core_type = #tpu.core_type<tc>, window_params = [{transform_indices = @transform_0, window_bounds = array<i64: 1, 8, 32>}, {pipeline_mode = #tpu.pipeline_mode<synchronous>, transform_indices = @transform_1, window_bounds = array<i64: 32, 96>}, {pipeline_mode = #tpu.pipeline_mode<synchronous>, transform_indices = @transform_2, window_bounds = array<i64: 1, 96>}, {pipeline_mode = #tpu.pipeline_mode<synchronous>, transform_indices = @transform_3, window_bounds = array<i64: 32, 32>}, {pipeline_mode = #tpu.pipeline_mode<synchronous>, transform_indices = @transform_4, window_bounds = array<i64: 1, 32>}, {pipeline_mode = #tpu.pipeline_mode<synchronous>, transform_indices = @transform_5, window_bounds = array<i64: 1, 32>}, {pipeline_mode = #tpu.pipeline_mode<synchronous>, transform_indices = @transform_6, window_bounds = array<i64: 1, 32>}, {transform_indices = @transform_7, window_bounds = array<i64: 1, 8, 32>}, {transform_indices = @transform_8, window_bounds = array<i64: 1, 4, 8, 8>}]} {
    %c0 = arith.constant 0 : index
    %c0_0 = arith.constant 0 : index
    %c0_1 = arith.constant 0 : index
    %0 = vector.load %arg1[%c0, %c0_0, %c0_1] : memref<1x8x32xf32, #tpu.memory_space<vmem>>, vector<1x8x32xf32>
    %1 = vector.shape_cast %0 : vector<1x8x32xf32> to vector<8x32xf32>
    %2 = arith.truncf %1 : vector<8x32xf32> to vector<8x32xbf16>
    %c0_2 = arith.constant 0 : index
    %c0_3 = arith.constant 0 : index
    %3 = vector.load %arg2[%c0_2, %c0_3] : memref<32x96xbf16, #tpu.memory_space<vmem>>, vector<32x96xbf16>
    %cst = arith.constant dense<0.000000e+00> : vector<8x96xf32>
    %4 = tpu.matmul %2, %3, %cst {dimension_numbers = #tpu.dot_dimension_numbers<[1], [0], [0], [1], [0, 0, 1, 1], [], []>} : vector<8x32xbf16>, vector<32x96xbf16>, vector<8x96xf32> -> vector<8x96xf32>
    %c0_4 = arith.constant 0 : index
    %c0_5 = arith.constant 0 : index
    %5 = vector.load %arg3[%c0_4, %c0_5] : memref<1x96xf32, #tpu.memory_space<vmem>>, vector<1x96xf32>
    %6 = vector.broadcast %5 : vector<1x96xf32> to vector<8x96xf32>
    %7 = arith.addf %4, %6 : vector<8x96xf32>
    %8 = vector.extract_strided_slice %7 {offsets = [0, 0], sizes = [8, 8], strides = [1, 1]} : vector<8x96xf32> to vector<8x8xf32>
    %9 = arith.truncf %8 : vector<8x8xf32> to vector<8x8xbf16>
    %10 = vector.extract_strided_slice %7 {offsets = [0, 32], sizes = [8, 8], strides = [1, 1]} : vector<8x96xf32> to vector<8x8xf32>
    %11 = arith.truncf %10 : vector<8x8xf32> to vector<8x8xbf16>
    %12 = vector.extract_strided_slice %7 {offsets = [0, 64], sizes = [8, 8], strides = [1, 1]} : vector<8x96xf32> to vector<8x8xf32>
    %13 = arith.truncf %12 : vector<8x8xf32> to vector<8x8xbf16>
    %cst_6 = arith.constant dense<0.000000e+00> : vector<8x8xf32>
    %14 = tpu.matmul %9, %11, %cst_6 {dimension_numbers = #tpu.dot_dimension_numbers<[1], [1], [0], [0], [0, 0, 1, 0], [], []>} : vector<8x8xbf16>, vector<8x8xbf16>, vector<8x8xf32> -> vector<8x8xf32>
    %cst_7 = arith.constant 0.353553385 : f32
    %15 = vector.broadcast %cst_7 : f32 to vector<8x8xf32>
    %16 = arith.mulf %14, %15 : vector<8x8xf32>
    %cst_8 = arith.constant dense<0xFF800000> : vector<8xf32>
    %17 = vector.multi_reduction <maximumf>, %16, %cst_8 [1] : vector<8x8xf32> to vector<8xf32>
    %18 = vector.shape_cast %17 : vector<8xf32> to vector<8x1xf32>
    %19 = vector.broadcast %18 : vector<8x1xf32> to vector<8x8xf32>
    %20 = arith.subf %16, %19 : vector<8x8xf32>
    %21 = math.exp %20 : vector<8x8xf32>
    %cst_9 = arith.constant dense<0.000000e+00> : vector<8xf32>
    %22 = vector.multi_reduction <add>, %21, %cst_9 [1] : vector<8x8xf32> to vector<8xf32>
    %23 = vector.shape_cast %22 : vector<8xf32> to vector<8x1xf32>
    %24 = tpu.reciprocal %23 : vector<8x1xf32> -> vector<8x1xf32>
    %25 = vector.broadcast %24 : vector<8x1xf32> to vector<8x8xf32>
    %26 = arith.mulf %21, %25 : vector<8x8xf32>
    %27 = arith.truncf %26 : vector<8x8xf32> to vector<8x8xbf16>
    %c0_10 = arith.constant 0 : index
    %c0_11 = arith.constant 0 : index
    %c0_12 = arith.constant 0 : index
    %c0_13 = arith.constant 0 : index
    %28 = vector.load %arg9[%c0_10, %c0_11, %c0_12, %c0_13] : memref<1x4x8x8xbf16, #tpu.memory_space<vmem>>, vector<1x1x8x8xbf16>
    %29 = vector.shape_cast %28 : vector<1x1x8x8xbf16> to vector<8x8xbf16>
    %30 = vector.shape_cast %27 : vector<8x8xbf16> to vector<1x1x8x8xbf16>
    tpu.vector_store %arg9[%c0_10, %c0_11, %c0_12, %c0_13], %30 {strides = array<i32>} : memref<1x4x8x8xbf16, #tpu.memory_space<vmem>>, vector<1x1x8x8xbf16>,
    %31 = arith.truncf %26 : vector<8x8xf32> to vector<8x8xbf16>
    %cst_14 = arith.constant dense<0.000000e+00> : vector<8x8xf32>
    %32 = tpu.matmul %31, %13, %cst_14 {dimension_numbers = #tpu.dot_dimension_numbers<[1], [0], [0], [1], [0, 0, 1, 1], [], []>} : vector<8x8xbf16>, vector<8x8xbf16>, vector<8x8xf32> -> vector<8x8xf32>
    %c0_15 = arith.constant 0 : index
    %c0_16 = arith.constant 0 : index
    %33 = vector.load %arg10[%c0_15, %c0_16] : memref<8x32xf32, #tpu.memory_space<vmem>>, vector<8x8xf32>
    tpu.vector_store %arg10[%c0_15, %c0_16], %32 {strides = array<i32>} : memref<8x32xf32, #tpu.memory_space<vmem>>, vector<8x8xf32>,
    %34 = vector.extract_strided_slice %7 {offsets = [0, 8], sizes = [8, 8], strides = [1, 1]} : vector<8x96xf32> to vector<8x8xf32>
    %35 = arith.truncf %34 : vector<8x8xf32> to vector<8x8xbf16>
    %36 = vector.extract_strided_slice %7 {offsets = [0, 40], sizes = [8, 8], strides = [1, 1]} : vector<8x96xf32> to vector<8x8xf32>
    %37 = arith.truncf %36 : vector<8x8xf32> to vector<8x8xbf16>
    %38 = vector.extract_strided_slice %7 {offsets = [0, 72], sizes = [8, 8], strides = [1, 1]} : vector<8x96xf32> to vector<8x8xf32>
    %39 = arith.truncf %38 : vector<8x8xf32> to vector<8x8xbf16>
    %cst_17 = arith.constant dense<0.000000e+00> : vector<8x8xf32>
    %40 = tpu.matmul %35, %37, %cst_17 {dimension_numbers = #tpu.dot_dimension_numbers<[1], [1], [0], [0], [0, 0, 1, 0], [], []>} : vector<8x8xbf16>, vector<8x8xbf16>, vector<8x8xf32> -> vector<8x8xf32>
    %cst_18 = arith.constant 0.353553385 : f32
    %41 = vector.broadcast %cst_18 : f32 to vector<8x8xf32>
    %42 = arith.mulf %40, %41 : vector<8x8xf32>
    %cst_19 = arith.constant dense<0xFF800000> : vector<8xf32>
    %43 = vector.multi_reduction <maximumf>, %42, %cst_19 [1] : vector<8x8xf32> to vector<8xf32>
    %44 = vector.shape_cast %43 : vector<8xf32> to vector<8x1xf32>
    %45 = vector.broadcast %44 : vector<8x1xf32> to vector<8x8xf32>
    %46 = arith.subf %42, %45 : vector<8x8xf32>
    %47 = math.exp %46 : vector<8x8xf32>
    %cst_20 = arith.constant dense<0.000000e+00> : vector<8xf32>
    %48 = vector.multi_reduction <add>, %47, %cst_20 [1] : vector<8x8xf32> to vector<8xf32>
    %49 = vector.shape_cast %48 : vector<8xf32> to vector<8x1xf32>
    %50 = tpu.reciprocal %49 : vector<8x1xf32> -> vector<8x1xf32>
    %51 = vector.broadcast %50 : vector<8x1xf32> to vector<8x8xf32>
    %52 = arith.mulf %47, %51 : vector<8x8xf32>
    %53 = arith.truncf %52 : vector<8x8xf32> to vector<8x8xbf16>
    %c0_21 = arith.constant 0 : index
    %c1 = arith.constant 1 : index
    %c0_22 = arith.constant 0 : index
    %c0_23 = arith.constant 0 : index
    %54 = vector.load %arg9[%c0_21, %c1, %c0_22, %c0_23] : memref<1x4x8x8xbf16, #tpu.memory_space<vmem>>, vector<1x1x8x8xbf16>
    %55 = vector.shape_cast %54 : vector<1x1x8x8xbf16> to vector<8x8xbf16>
    %56 = vector.shape_cast %53 : vector<8x8xbf16> to vector<1x1x8x8xbf16>
    tpu.vector_store %arg9[%c0_21, %c1, %c0_22, %c0_23], %56 {strides = array<i32>} : memref<1x4x8x8xbf16, #tpu.memory_space<vmem>>, vector<1x1x8x8xbf16>,
    %57 = arith.truncf %52 : vector<8x8xf32> to vector<8x8xbf16>
    %cst_24 = arith.constant dense<0.000000e+00> : vector<8x8xf32>
    %58 = tpu.matmul %57, %39, %cst_24 {dimension_numbers = #tpu.dot_dimension_numbers<[1], [0], [0], [1], [0, 0, 1, 1], [], []>} : vector<8x8xbf16>, vector<8x8xbf16>, vector<8x8xf32> -> vector<8x8xf32>
    %c0_25 = arith.constant 0 : index
    %c8 = arith.constant 8 : index
    %59 = vector.load %arg10[%c0_25, %c8] : memref<8x32xf32, #tpu.memory_space<vmem>>, vector<8x8xf32>
    tpu.vector_store %arg10[%c0_25, %c8], %58 {strides = array<i32>} : memref<8x32xf32, #tpu.memory_space<vmem>>, vector<8x8xf32>,
    %60 = vector.extract_strided_slice %7 {offsets = [0, 16], sizes = [8, 8], strides = [1, 1]} : vector<8x96xf32> to vector<8x8xf32>
    %61 = arith.truncf %60 : vector<8x8xf32> to vector<8x8xbf16>
    %62 = vector.extract_strided_slice %7 {offsets = [0, 48], sizes = [8, 8], strides = [1, 1]} : vector<8x96xf32> to vector<8x8xf32>
    %63 = arith.truncf %62 : vector<8x8xf32> to vector<8x8xbf16>
    %64 = vector.extract_strided_slice %7 {offsets = [0, 80], sizes = [8, 8], strides = [1, 1]} : vector<8x96xf32> to vector<8x8xf32>
    %65 = arith.truncf %64 : vector<8x8xf32> to vector<8x8xbf16>
    %cst_26 = arith.constant dense<0.000000e+00> : vector<8x8xf32>
    %66 = tpu.matmul %61, %63, %cst_26 {dimension_numbers = #tpu.dot_dimension_numbers<[1], [1], [0], [0], [0, 0, 1, 0], [], []>} : vector<8x8xbf16>, vector<8x8xbf16>, vector<8x8xf32> -> vector<8x8xf32>
    %cst_27 = arith.constant 0.353553385 : f32
    %67 = vector.broadcast %cst_27 : f32 to vector<8x8xf32>
    %68 = arith.mulf %66, %67 : vector<8x8xf32>
    %cst_28 = arith.constant dense<0xFF800000> : vector<8xf32>
    %69 = vector.multi_reduction <maximumf>, %68, %cst_28 [1] : vector<8x8xf32> to vector<8xf32>
    %70 = vector.shape_cast %69 : vector<8xf32> to vector<8x1xf32>
    %71 = vector.broadcast %70 : vector<8x1xf32> to vector<8x8xf32>
    %72 = arith.subf %68, %71 : vector<8x8xf32>
    %73 = math.exp %72 : vector<8x8xf32>
    %cst_29 = arith.constant dense<0.000000e+00> : vector<8xf32>
    %74 = vector.multi_reduction <add>, %73, %cst_29 [1] : vector<8x8xf32> to vector<8xf32>
    %75 = vector.shape_cast %74 : vector<8xf32> to vector<8x1xf32>
    %76 = tpu.reciprocal %75 : vector<8x1xf32> -> vector<8x1xf32>
    %77 = vector.broadcast %76 : vector<8x1xf32> to vector<8x8xf32>
    %78 = arith.mulf %73, %77 : vector<8x8xf32>
    %79 = arith.truncf %78 : vector<8x8xf32> to vector<8x8xbf16>
    %c0_30 = arith.constant 0 : index
    %c2 = arith.constant 2 : index
    %c0_31 = arith.constant 0 : index
    %c0_32 = arith.constant 0 : index
    %80 = vector.load %arg9[%c0_30, %c2, %c0_31, %c0_32] : memref<1x4x8x8xbf16, #tpu.memory_space<vmem>>, vector<1x1x8x8xbf16>
    %81 = vector.shape_cast %80 : vector<1x1x8x8xbf16> to vector<8x8xbf16>
    %82 = vector.shape_cast %79 : vector<8x8xbf16> to vector<1x1x8x8xbf16>
    tpu.vector_store %arg9[%c0_30, %c2, %c0_31, %c0_32], %82 {strides = array<i32>} : memref<1x4x8x8xbf16, #tpu.memory_space<vmem>>, vector<1x1x8x8xbf16>,
    %83 = arith.truncf %78 : vector<8x8xf32> to vector<8x8xbf16>
    %cst_33 = arith.constant dense<0.000000e+00> : vector<8x8xf32>
    %84 = tpu.matmul %83, %65, %cst_33 {dimension_numbers = #tpu.dot_dimension_numbers<[1], [0], [0], [1], [0, 0, 1, 1], [], []>} : vector<8x8xbf16>, vector<8x8xbf16>, vector<8x8xf32> -> vector<8x8xf32>
    %c0_34 = arith.constant 0 : index
    %c16 = arith.constant 16 : index
    %85 = vector.load %arg10[%c0_34, %c16] : memref<8x32xf32, #tpu.memory_space<vmem>>, vector<8x8xf32>
    tpu.vector_store %arg10[%c0_34, %c16], %84 {strides = array<i32>} : memref<8x32xf32, #tpu.memory_space<vmem>>, vector<8x8xf32>,
    %86 = vector.extract_strided_slice %7 {offsets = [0, 24], sizes = [8, 8], strides = [1, 1]} : vector<8x96xf32> to vector<8x8xf32>
    %87 = arith.truncf %86 : vector<8x8xf32> to vector<8x8xbf16>
    %88 = vector.extract_strided_slice %7 {offsets = [0, 56], sizes = [8, 8], strides = [1, 1]} : vector<8x96xf32> to vector<8x8xf32>
    %89 = arith.truncf %88 : vector<8x8xf32> to vector<8x8xbf16>
    %90 = vector.extract_strided_slice %7 {offsets = [0, 88], sizes = [8, 8], strides = [1, 1]} : vector<8x96xf32> to vector<8x8xf32>
    %91 = arith.truncf %90 : vector<8x8xf32> to vector<8x8xbf16>
    %cst_35 = arith.constant dense<0.000000e+00> : vector<8x8xf32>
    %92 = tpu.matmul %87, %89, %cst_35 {dimension_numbers = #tpu.dot_dimension_numbers<[1], [1], [0], [0], [0, 0, 1, 0], [], []>} : vector<8x8xbf16>, vector<8x8xbf16>, vector<8x8xf32> -> vector<8x8xf32>
    %cst_36 = arith.constant 0.353553385 : f32
    %93 = vector.broadcast %cst_36 : f32 to vector<8x8xf32>
    %94 = arith.mulf %92, %93 : vector<8x8xf32>
    %cst_37 = arith.constant dense<0xFF800000> : vector<8xf32>
    %95 = vector.multi_reduction <maximumf>, %94, %cst_37 [1] : vector<8x8xf32> to vector<8xf32>
    %96 = vector.shape_cast %95 : vector<8xf32> to vector<8x1xf32>
    %97 = vector.broadcast %96 : vector<8x1xf32> to vector<8x8xf32>
    %98 = arith.subf %94, %97 : vector<8x8xf32>
    %99 = math.exp %98 : vector<8x8xf32>
    %cst_38 = arith.constant dense<0.000000e+00> : vector<8xf32>
    %100 = vector.multi_reduction <add>, %99, %cst_38 [1] : vector<8x8xf32> to vector<8xf32>
    %101 = vector.shape_cast %100 : vector<8xf32> to vector<8x1xf32>
    %102 = tpu.reciprocal %101 : vector<8x1xf32> -> vector<8x1xf32>
    %103 = vector.broadcast %102 : vector<8x1xf32> to vector<8x8xf32>
    %104 = arith.mulf %99, %103 : vector<8x8xf32>
    %105 = arith.truncf %104 : vector<8x8xf32> to vector<8x8xbf16>
    %c0_39 = arith.constant 0 : index
    %c3 = arith.constant 3 : index
    %c0_40 = arith.constant 0 : index
    %c0_41 = arith.constant 0 : index
    %106 = vector.load %arg9[%c0_39, %c3, %c0_40, %c0_41] : memref<1x4x8x8xbf16, #tpu.memory_space<vmem>>, vector<1x1x8x8xbf16>
    %107 = vector.shape_cast %106 : vector<1x1x8x8xbf16> to vector<8x8xbf16>
    %108 = vector.shape_cast %105 : vector<8x8xbf16> to vector<1x1x8x8xbf16>
    tpu.vector_store %arg9[%c0_39, %c3, %c0_40, %c0_41], %108 {strides = array<i32>} : memref<1x4x8x8xbf16, #tpu.memory_space<vmem>>, vector<1x1x8x8xbf16>,
    %109 = arith.truncf %104 : vector<8x8xf32> to vector<8x8xbf16>
    %cst_42 = arith.constant dense<0.000000e+00> : vector<8x8xf32>
    %110 = tpu.matmul %109, %91, %cst_42 {dimension_numbers = #tpu.dot_dimension_numbers<[1], [0], [0], [1], [0, 0, 1, 1], [], []>} : vector<8x8xbf16>, vector<8x8xbf16>, vector<8x8xf32> -> vector<8x8xf32>
    %c0_43 = arith.constant 0 : index
    %c24 = arith.constant 24 : index
    %111 = vector.load %arg10[%c0_43, %c24] : memref<8x32xf32, #tpu.memory_space<vmem>>, vector<8x8xf32>
    tpu.vector_store %arg10[%c0_43, %c24], %110 {strides = array<i32>} : memref<8x32xf32, #tpu.memory_space<vmem>>, vector<8x8xf32>,
    %c0_44 = arith.constant 0 : index
    %c0_45 = arith.constant 0 : index
    %112 = vector.load %arg10[%c0_44, %c0_45] : memref<8x32xf32, #tpu.memory_space<vmem>>, vector<8x32xf32>
    %113 = arith.truncf %112 : vector<8x32xf32> to vector<8x32xbf16>
    %c0_46 = arith.constant 0 : index
    %c0_47 = arith.constant 0 : index
    %114 = vector.load %arg4[%c0_46, %c0_47] : memref<32x32xbf16, #tpu.memory_space<vmem>>, vector<32x32xbf16>
    %cst_48 = arith.constant dense<0.000000e+00> : vector<8x32xf32>
    %115 = tpu.matmul %113, %114, %cst_48 {dimension_numbers = #tpu.dot_dimension_numbers<[1], [0], [0], [1], [0, 0, 1, 1], [], []>} : vector<8x32xbf16>, vector<32x32xbf16>, vector<8x32xf32> -> vector<8x32xf32>
    %c0_49 = arith.constant 0 : index
    %c0_50 = arith.constant 0 : index
    %116 = vector.load %arg5[%c0_49, %c0_50] : memref<1x32xf32, #tpu.memory_space<vmem>>, vector<1x32xf32>
    %117 = vector.broadcast %116 : vector<1x32xf32> to vector<8x32xf32>
    %118 = arith.addf %115, %117 : vector<8x32xf32>
    %119 = arith.addf %1, %118 : vector<8x32xf32>
    %cst_51 = arith.constant dense<0.000000e+00> : vector<8xf32>
    %120 = vector.multi_reduction <add>, %119, %cst_51 [1] : vector<8x32xf32> to vector<8xf32>
    %121 = vector.shape_cast %120 : vector<8xf32> to vector<8x1xf32>
    %cst_52 = arith.constant 3.200000e+01 : f32
    %122 = vector.broadcast %cst_52 : f32 to vector<8x1xf32>
    %123 = arith.divf %121, %122 : vector<8x1xf32>
    %124 = vector.broadcast %123 : vector<8x1xf32> to vector<8x32xf32>
    %125 = arith.subf %119, %124 : vector<8x32xf32>
    %126 = vector.broadcast %123 : vector<8x1xf32> to vector<8x32xf32>
    %127 = arith.subf %119, %126 : vector<8x32xf32>
    %128 = arith.mulf %125, %127 : vector<8x32xf32>
    %cst_53 = arith.constant dense<0.000000e+00> : vector<8xf32>
    %129 = vector.multi_reduction <add>, %128, %cst_53 [1] : vector<8x32xf32> to vector<8xf32>
    %130 = vector.shape_cast %129 : vector<8xf32> to vector<8x1xf32>
    %cst_54 = arith.constant 3.200000e+01 : f32
    %131 = vector.broadcast %cst_54 : f32 to vector<8x1xf32>
    %132 = arith.divf %130, %131 : vector<8x1xf32>
    %133 = vector.broadcast %123 : vector<8x1xf32> to vector<8x32xf32>
    %134 = arith.subf %119, %133 : vector<8x32xf32>
    %cst_55 = arith.constant 9.99999974E-6 : f32
    %135 = vector.broadcast %cst_55 : f32 to vector<8x1xf32>
    %136 = arith.addf %132, %135 : vector<8x1xf32>
    %137 = math.rsqrt %136 : vector<8x1xf32>
    %138 = vector.broadcast %137 : vector<8x1xf32> to vector<8x32xf32>
    %139 = arith.mulf %134, %138 : vector<8x32xf32>
    %c0_56 = arith.constant 0 : index
    %c0_57 = arith.constant 0 : index
    %140 = vector.load %arg6[%c0_56, %c0_57] : memref<1x32xf32, #tpu.memory_space<vmem>>, vector<1x32xf32>
    %141 = vector.broadcast %140 : vector<1x32xf32> to vector<8x32xf32>
    %142 = arith.mulf %139, %141 : vector<8x32xf32>
    %c0_58 = arith.constant 0 : index
    %c0_59 = arith.constant 0 : index
    %143 = vector.load %arg7[%c0_58, %c0_59] : memref<1x32xf32, #tpu.memory_space<vmem>>, vector<1x32xf32>
    %144 = vector.broadcast %143 : vector<1x32xf32> to vector<8x32xf32>
    %145 = arith.addf %142, %144 : vector<8x32xf32>
    %c0_60 = arith.constant 0 : index
    %c0_61 = arith.constant 0 : index
    %c0_62 = arith.constant 0 : index
    %146 = vector.load %arg8[%c0_60, %c0_61, %c0_62] : memref<1x8x32xf32, #tpu.memory_space<vmem>>, vector<1x8x32xf32>
    %147 = vector.shape_cast %146 : vector<1x8x32xf32> to vector<8x32xf32>
    %148 = vector.shape_cast %145 : vector<8x32xf32> to vector<1x8x32xf32>
    tpu.vector_store %arg8[%c0_60, %c0_61, %c0_62], %148 {strides = array<i32>} : memref<1x8x32xf32, #tpu.memory_space<vmem>>, vector<1x8x32xf32>,
    return
  }
  func.func @transform_0(%arg0: i32) -> (i32, i32, i32) {
    %c0_i32 = arith.constant 0 : i32
    %c0_i32_0 = arith.constant 0 : i32
    %c0_i32_1 = arith.constant 0 : i32
    return %arg0, %c0_i32, %c0_i32_0 : i32, i32, i32
  }
  func.func @transform_1(%arg0: i32) -> (i32, i32) {
    %c0_i32 = arith.constant 0 : i32
    %c0_i32_0 = arith.constant 0 : i32
    %c0_i32_1 = arith.constant 0 : i32
    return %c0_i32, %c0_i32_0 : i32, i32
  }
  func.func @transform_2(%arg0: i32) -> (i32, i32) {
    %c0_i32 = arith.constant 0 : i32
    %c0_i32_0 = arith.constant 0 : i32
    %c0_i32_1 = arith.constant 0 : i32
    return %c0_i32, %c0_i32_0 : i32, i32
  }
  func.func @transform_3(%arg0: i32) -> (i32, i32) {
    %c0_i32 = arith.constant 0 : i32
    %c0_i32_0 = arith.constant 0 : i32
    %c0_i32_1 = arith.constant 0 : i32
    return %c0_i32, %c0_i32_0 : i32, i32
  }
  func.func @transform_4(%arg0: i32) -> (i32, i32) {
    %c0_i32 = arith.constant 0 : i32
    %c0_i32_0 = arith.constant 0 : i32
    %c0_i32_1 = arith.constant 0 : i32
    return %c0_i32, %c0_i32_0 : i32, i32
  }
  func.func @transform_5(%arg0: i32) -> (i32, i32) {
    %c0_i32 = arith.constant 0 : i32
    %c0_i32_0 = arith.constant 0 : i32
    %c0_i32_1 = arith.constant 0 : i32
    return %c0_i32, %c0_i32_0 : i32, i32
  }
  func.func @transform_6(%arg0: i32) -> (i32, i32) {
    %c0_i32 = arith.constant 0 : i32
    %c0_i32_0 = arith.constant 0 : i32
    %c0_i32_1 = arith.constant 0 : i32
    return %c0_i32, %c0_i32_0 : i32, i32
  }
  func.func @transform_7(%arg0: i32) -> (i32, i32, i32) {
    %c0_i32 = arith.constant 0 : i32
    %c0_i32_0 = arith.constant 0 : i32
    %c0_i32_1 = arith.constant 0 : i32
    return %arg0, %c0_i32, %c0_i32_0 : i32, i32, i32
  }
  func.func @transform_8(%arg0: i32) -> (i32, i32, i32, i32) {
    %c0_i32 = arith.constant 0 : i32
    %c0_i32_0 = arith.constant 0 : i32
    %c0_i32_1 = arith.constant 0 : i32
    %c0_i32_2 = arith.constant 0 : i32
    return %arg0, %c0_i32, %c0_i32_0, %c0_i32_1 : i32, i32, i32, i32
  }
}

module attributes {stable_mosaic.version = 11 : i64} {
  func.func @_attn_block_kernel(%arg0: i32, %arg1: memref<1x8x32xf32, #tpu.memory_space<vmem>>, %arg2: memref<32x96xbf16, #tpu.memory_space<vmem>>, %arg3: memref<1x96xf32, #tpu.memory_space<vmem>>, %arg4: memref<32x32xbf16, #tpu.memory_space<vmem>>, %arg5: memref<1x32xf32, #tpu.memory_space<vmem>>, %arg6: memref<1x32xf32, #tpu.memory_space<vmem>>, %arg7: memref<1x32xf32, #tpu.memory_space<vmem>>, %arg8: memref<1x8x32xf32, #tpu.memory_space<vmem>>, %arg9: memref<1x4x8x8xbf16, #tpu.memory_space<vmem>>, %arg10: memref<8x32xf32, #tpu.memory_space<vmem>>) attributes {dimension_semantics = [#tpu.dimension_semantics<parallel>], iteration_bounds = array<i64: 2>, scalar_prefetch = 0 : i64, scratch_operands = 1 : i64, tpu.core_type = #tpu.core_type<tc>, window_params = [{transform_indices = @transform_0, window_bounds = array<i64: 1, 8, 32>}, {pipeline_mode = #tpu.pipeline_mode<synchronous>, transform_indices = @transform_1, window_bounds = array<i64: 32, 96>}, {pipeline_mode = #tpu.pipeline_mode<synchronous>, transform_indices = @transform_2, window_bounds = array<i64: 1, 96>}, {pipeline_mode = #tpu.pipeline_mode<synchronous>, transform_indices = @transform_3, window_bounds = array<i64: 32, 32>}, {pipeline_mode = #tpu.pipeline_mode<synchronous>, transform_indices = @transform_4, window_bounds = array<i64: 1, 32>}, {pipeline_mode = #tpu.pipeline_mode<synchronous>, transform_indices = @transform_5, window_bounds = array<i64: 1, 32>}, {pipeline_mode = #tpu.pipeline_mode<synchronous>, transform_indices = @transform_6, window_bounds = array<i64: 1, 32>}, {transform_indices = @transform_7, window_bounds = array<i64: 1, 8, 32>}, {transform_indices = @transform_8, window_bounds = array<i64: 1, 4, 8, 8>}]} {
    %c0 = arith.constant 0 : index
    %c0_0 = arith.constant 0 : index
    %c0_1 = arith.constant 0 : index
    %0 = vector.load %arg1[%c0, %c0_0, %c0_1] : memref<1x8x32xf32, #tpu.memory_space<vmem>>, vector<1x8x32xf32>
    %1 = vector.shape_cast %0 : vector<1x8x32xf32> to vector<8x32xf32>
    %2 = arith.truncf %1 : vector<8x32xf32> to vector<8x32xbf16>
    %c0_2 = arith.constant 0 : index
    %c0_3 = arith.constant 0 : index
    %3 = vector.load %arg2[%c0_2, %c0_3] : memref<32x96xbf16, #tpu.memory_space<vmem>>, vector<32x96xbf16>
    %cst = arith.constant dense<0.000000e+00> : vector<8x96xf32>
    %4 = tpu.matmul %2, %3, %cst {dimension_numbers = #tpu.dot_dimension_numbers<[1], [0], [0], [1], [0, 0, 1, 1], [], []>} : vector<8x32xbf16>, vector<32x96xbf16>, vector<8x96xf32> -> vector<8x96xf32>
    %c0_4 = arith.constant 0 : index
    %c0_5 = arith.constant 0 : index
    %5 = vector.load %arg3[%c0_4, %c0_5] : memref<1x96xf32, #tpu.memory_space<vmem>>, vector<1x96xf32>
    %6 = vector.broadcast %5 : vector<1x96xf32> to vector<8x96xf32>
    %7 = arith.addf %4, %6 : vector<8x96xf32>
    %8 = vector.extract_strided_slice %7 {offsets = [0, 0], sizes = [8, 8], strides = [1, 1]} : vector<8x96xf32> to vector<8x8xf32>
    %9 = arith.truncf %8 : vector<8x8xf32> to vector<8x8xbf16>
    %10 = vector.extract_strided_slice %7 {offsets = [0, 32], sizes = [8, 8], strides = [1, 1]} : vector<8x96xf32> to vector<8x8xf32>
    %11 = arith.truncf %10 : vector<8x8xf32> to vector<8x8xbf16>
    %12 = vector.extract_strided_slice %7 {offsets = [0, 64], sizes = [8, 8], strides = [1, 1]} : vector<8x96xf32> to vector<8x8xf32>
    %13 = arith.truncf %12 : vector<8x8xf32> to vector<8x8xbf16>
    %cst_6 = arith.constant dense<0.000000e+00> : vector<8x8xf32>
    %14 = tpu.matmul %9, %11, %cst_6 {dimension_numbers = #tpu.dot_dimension_numbers<[1], [1], [0], [0], [0, 0, 1, 0], [], []>} : vector<8x8xbf16>, vector<8x8xbf16>, vector<8x8xf32> -> vector<8x8xf32>
    %cst_7 = arith.constant 0.353553385 : f32
    %15 = vector.broadcast %cst_7 : f32 to vector<8x8xf32>
    %16 = arith.mulf %14, %15 : vector<8x8xf32>
    %cst_8 = arith.constant dense<0xFF800000> : vector<8xf32>
    %17 = vector.multi_reduction <maximumf>, %16, %cst_8 [1] : vector<8x8xf32> to vector<8xf32>
    %18 = vector.shape_cast %17 : vector<8xf32> to vector<8x1xf32>
    %19 = vector.broadcast %18 : vector<8x1xf32> to vector<8x8xf32>
    %20 = arith.subf %16, %19 : vector<8x8xf32>
    %21 = math.exp %20 : vector<8x8xf32>
    %cst_9 = arith.constant dense<0.000000e+00> : vector<8xf32>
    %22 = vector.multi_reduction <add>, %21, %cst_9 [1] : vector<8x8xf32> to vector<8xf32>
    %23 = vector.shape_cast %22 : vector<8xf32> to vector<8x1xf32>
    %24 = tpu.reciprocal %23 : vector<8x1xf32> -> vector<8x1xf32>
    %25 = vector.broadcast %24 : vector<8x1xf32> to vector<8x8xf32>
    %26 = arith.mulf %21, %25 : vector<8x8xf32>
    %27 = arith.truncf %26 : vector<8x8xf32> to vector<8x8xbf16>
    %c0_10 = arith.constant 0 : index
    %c0_11 = arith.constant 0 : index
    %c0_12 = arith.constant 0 : index
    %c0_13 = arith.constant 0 : index
    %28 = vector.load %arg9[%c0_10, %c0_11, %c0_12, %c0_13] : memref<1x4x8x8xbf16, #tpu.memory_space<vmem>>, vector<1x1x8x8xbf16>
    %29 = vector.shape_cast %28 : vector<1x1x8x8xbf16> to vector<8x8xbf16>
    %30 = vector.shape_cast %27 : vector<8x8xbf16> to vector<1x1x8x8xbf16>
    tpu.vector_store %arg9[%c0_10, %c0_11, %c0_12, %c0_13], %30 {strides = array<i32>} : memref<1x4x8x8xbf16, #tpu.memory_space<vmem>>, vector<1x1x8x8xbf16>,
    %31 = arith.truncf %26 : vector<8x8xf32> to vector<8x8xbf16>
    %cst_14 = arith.constant dense<0.000000e+00> : vector<8x8xf32>
    %32 = tpu.matmul %31, %13, %cst_14 {dimension_numbers = #tpu.dot_dimension_numbers<[1], [0], [0], [1], [0, 0, 1, 1], [], []>} : vector<8x8xbf16>, vector<8x8xbf16>, vector<8x8xf32> -> vector<8x8xf32>
    %c0_15 = arith.constant 0 : index
    %c0_16 = arith.constant 0 : index
    %33 = vector.load %arg10[%c0_15, %c0_16] : memref<8x32xf32, #tpu.memory_space<vmem>>, vector<8x8xf32>
    tpu.vector_store %arg10[%c0_15, %c0_16], %32 {strides = array<i32>} : memref<8x32xf32, #tpu.memory_space<vmem>>, vector<8x8xf32>,
    %34 = vector.extract_strided_slice %7 {offsets = [0, 8], sizes = [8, 8], strides = [1, 1]} : vector<8x96xf32> to vector<8x8xf32>
    %35 = arith.truncf %34 : vector<8x8xf32> to vector<8x8xbf16>
    %36 = vector.extract_strided_slice %7 {offsets = [0, 40], sizes = [8, 8], strides = [1, 1]} : vector<8x96xf32> to vector<8x8xf32>
    %37 = arith.truncf %36 : vector<8x8xf32> to vector<8x8xbf16>
    %38 = vector.extract_strided_slice %7 {offsets = [0, 72], sizes = [8, 8], strides = [1, 1]} : vector<8x96xf32> to vector<8x8xf32>
    %39 = arith.truncf %38 : vector<8x8xf32> to vector<8x8xbf16>
    %cst_17 = arith.constant dense<0.000000e+00> : vector<8x8xf32>
    %40 = tpu.matmul %35, %37, %cst_17 {dimension_numbers = #tpu.dot_dimension_numbers<[1], [1], [0], [0], [0, 0, 1, 0], [], []>} : vector<8x8xbf16>, vector<8x8xbf16>, vector<8x8xf32> -> vector<8x8xf32>
    %cst_18 = arith.constant 0.353553385 : f32
    %41 = vector.broadcast %cst_18 : f32 to vector<8x8xf32>
    %42 = arith.mulf %40, %41 : vector<8x8xf32>
    %cst_19 = arith.constant dense<0xFF800000> : vector<8xf32>
    %43 = vector.multi_reduction <maximumf>, %42, %cst_19 [1] : vector<8x8xf32> to vector<8xf32>
    %44 = vector.shape_cast %43 : vector<8xf32> to vector<8x1xf32>
    %45 = vector.broadcast %44 : vector<8x1xf32> to vector<8x8xf32>
    %46 = arith.subf %42, %45 : vector<8x8xf32>
    %47 = math.exp %46 : vector<8x8xf32>
    %cst_20 = arith.constant dense<0.000000e+00> : vector<8xf32>
    %48 = vector.multi_reduction <add>, %47, %cst_20 [1] : vector<8x8xf32> to vector<8xf32>
    %49 = vector.shape_cast %48 : vector<8xf32> to vector<8x1xf32>
    %50 = tpu.reciprocal %49 : vector<8x1xf32> -> vector<8x1xf32>
    %51 = vector.broadcast %50 : vector<8x1xf32> to vector<8x8xf32>
    %52 = arith.mulf %47, %51 : vector<8x8xf32>
    %53 = arith.truncf %52 : vector<8x8xf32> to vector<8x8xbf16>
    %c0_21 = arith.constant 0 : index
    %c1 = arith.constant 1 : index
    %c0_22 = arith.constant 0 : index
    %c0_23 = arith.constant 0 : index
    %54 = vector.load %arg9[%c0_21, %c1, %c0_22, %c0_23] : memref<1x4x8x8xbf16, #tpu.memory_space<vmem>>, vector<1x1x8x8xbf16>
    %55 = vector.shape_cast %54 : vector<1x1x8x8xbf16> to vector<8x8xbf16>
    %56 = vector.shape_cast %53 : vector<8x8xbf16> to vector<1x1x8x8xbf16>
    tpu.vector_store %arg9[%c0_21, %c1, %c0_22, %c0_23], %56 {strides = array<i32>} : memref<1x4x8x8xbf16, #tpu.memory_space<vmem>>, vector<1x1x8x8xbf16>,
    %57 = arith.truncf %52 : vector<8x8xf32> to vector<8x8xbf16>
    %cst_24 = arith.constant dense<0.000000e+00> : vector<8x8xf32>
    %58 = tpu.matmul %57, %39, %cst_24 {dimension_numbers = #tpu.dot_dimension_numbers<[1], [0], [0], [1], [0, 0, 1, 1], [], []>} : vector<8x8xbf16>, vector<8x8xbf16>, vector<8x8xf32> -> vector<8x8xf32>
    %c0_25 = arith.constant 0 : index
    %c8 = arith.constant 8 : index
    %59 = vector.load %arg10[%c0_25, %c8] : memref<8x32xf32, #tpu.memory_space<vmem>>, vector<8x8xf32>
    tpu.vector_store %arg10[%c0_25, %c8], %58 {strides = array<i32>} : memref<8x32xf32, #tpu.memory_space<vmem>>, vector<8x8xf32>,
    %60 = vector.extract_strided_slice %7 {offsets = [0, 16], sizes = [8, 8], strides = [1, 1]} : vector<8x96xf32> to vector<8x8xf32>
    %61 = arith.truncf %60 : vector<8x8xf32> to vector<8x8xbf16>
    %62 = vector.extract_strided_slice %7 {offsets = [0, 48], sizes = [8, 8], strides = [1, 1]} : vector<8x96xf32> to vector<8x8xf32>
    %63 = arith.truncf %62 : vector<8x8xf32> to vector<8x8xbf16>
    %64 = vector.extract_strided_slice %7 {offsets = [0, 80], sizes = [8, 8], strides = [1, 1]} : vector<8x96xf32> to vector<8x8xf32>
    %65 = arith.truncf %64 : vector<8x8xf32> to vector<8x8xbf16>
    %cst_26 = arith.constant dense<0.000000e+00> : vector<8x8xf32>
    %66 = tpu.matmul %61, %63, %cst_26 {dimension_numbers = #tpu.dot_dimension_numbers<[1], [1], [0], [0], [0, 0, 1, 0], [], []>} : vector<8x8xbf16>, vector<8x8xbf16>, vector<8x8xf32> -> vector<8x8xf32>
    %cst_27 = arith.constant 0.353553385 : f32
    %67 = vector.broadcast %cst_27 : f32 to vector<8x8xf32>
    %68 = arith.mulf %66, %67 : vector<8x8xf32>
    %cst_28 = arith.constant dense<0xFF800000> : vector<8xf32>
    %69 = vector.multi_reduction <maximumf>, %68, %cst_28 [1] : vector<8x8xf32> to vector<8xf32>
    %70 = vector.shape_cast %69 : vector<8xf32> to vector<8x1xf32>
    %71 = vector.broadcast %70 : vector<8x1xf32> to vector<8x8xf32>
    %72 = arith.subf %68, %71 : vector<8x8xf32>
    %73 = math.exp %72 : vector<8x8xf32>
    %cst_29 = arith.constant dense<0.000000e+00> : vector<8xf32>
    %74 = vector.multi_reduction <add>, %73, %cst_29 [1] : vector<8x8xf32> to vector<8xf32>
    %75 = vector.shape_cast %74 : vector<8xf32> to vector<8x1xf32>
    %76 = tpu.reciprocal %75 : vector<8x1xf32> -> vector<8x1xf32>
    %77 = vector.broadcast %76 : vector<8x1xf32> to vector<8x8xf32>
    %78 = arith.mulf %73, %77 : vector<8x8xf32>
    %79 = arith.truncf %78 : vector<8x8xf32> to vector<8x8xbf16>
    %c0_30 = arith.constant 0 : index
    %c2 = arith.constant 2 : index
    %c0_31 = arith.constant 0 : index
    %c0_32 = arith.constant 0 : index
    %80 = vector.load %arg9[%c0_30, %c2, %c0_31, %c0_32] : memref<1x4x8x8xbf16, #tpu.memory_space<vmem>>, vector<1x1x8x8xbf16>
    %81 = vector.shape_cast %80 : vector<1x1x8x8xbf16> to vector<8x8xbf16>
    %82 = vector.shape_cast %79 : vector<8x8xbf16> to vector<1x1x8x8xbf16>
    tpu.vector_store %arg9[%c0_30, %c2, %c0_31, %c0_32], %82 {strides = array<i32>} : memref<1x4x8x8xbf16, #tpu.memory_space<vmem>>, vector<1x1x8x8xbf16>,
    %83 = arith.truncf %78 : vector<8x8xf32> to vector<8x8xbf16>
    %cst_33 = arith.constant dense<0.000000e+00> : vector<8x8xf32>
    %84 = tpu.matmul %83, %65, %cst_33 {dimension_numbers = #tpu.dot_dimension_numbers<[1], [0], [0], [1], [0, 0, 1, 1], [], []>} : vector<8x8xbf16>, vector<8x8xbf16>, vector<8x8xf32> -> vector<8x8xf32>
    %c0_34 = arith.constant 0 : index
    %c16 = arith.constant 16 : index
    %85 = vector.load %arg10[%c0_34, %c16] : memref<8x32xf32, #tpu.memory_space<vmem>>, vector<8x8xf32>
    tpu.vector_store %arg10[%c0_34, %c16], %84 {strides = array<i32>} : memref<8x32xf32, #tpu.memory_space<vmem>>, vector<8x8xf32>,
    %86 = vector.extract_strided_slice %7 {offsets = [0, 24], sizes = [8, 8], strides = [1, 1]} : vector<8x96xf32> to vector<8x8xf32>
    %87 = arith.truncf %86 : vector<8x8xf32> to vector<8x8xbf16>
    %88 = vector.extract_strided_slice %7 {offsets = [0, 56], sizes = [8, 8], strides = [1, 1]} : vector<8x96xf32> to vector<8x8xf32>
    %89 = arith.truncf %88 : vector<8x8xf32> to vector<8x8xbf16>
    %90 = vector.extract_strided_slice %7 {offsets = [0, 88], sizes = [8, 8], strides = [1, 1]} : vector<8x96xf32> to vector<8x8xf32>
    %91 = arith.truncf %90 : vector<8x8xf32> to vector<8x8xbf16>
    %cst_35 = arith.constant dense<0.000000e+00> : vector<8x8xf32>
    %92 = tpu.matmul %87, %89, %cst_35 {dimension_numbers = #tpu.dot_dimension_numbers<[1], [1], [0], [0], [0, 0, 1, 0], [], []>} : vector<8x8xbf16>, vector<8x8xbf16>, vector<8x8xf32> -> vector<8x8xf32>
    %cst_36 = arith.constant 0.353553385 : f32
    %93 = vector.broadcast %cst_36 : f32 to vector<8x8xf32>
    %94 = arith.mulf %92, %93 : vector<8x8xf32>
    %cst_37 = arith.constant dense<0xFF800000> : vector<8xf32>
    %95 = vector.multi_reduction <maximumf>, %94, %cst_37 [1] : vector<8x8xf32> to vector<8xf32>
    %96 = vector.shape_cast %95 : vector<8xf32> to vector<8x1xf32>
    %97 = vector.broadcast %96 : vector<8x1xf32> to vector<8x8xf32>
    %98 = arith.subf %94, %97 : vector<8x8xf32>
    %99 = math.exp %98 : vector<8x8xf32>
    %cst_38 = arith.constant dense<0.000000e+00> : vector<8xf32>
    %100 = vector.multi_reduction <add>, %99, %cst_38 [1] : vector<8x8xf32> to vector<8xf32>
    %101 = vector.shape_cast %100 : vector<8xf32> to vector<8x1xf32>
    %102 = tpu.reciprocal %101 : vector<8x1xf32> -> vector<8x1xf32>
    %103 = vector.broadcast %102 : vector<8x1xf32> to vector<8x8xf32>
    %104 = arith.mulf %99, %103 : vector<8x8xf32>
    %105 = arith.truncf %104 : vector<8x8xf32> to vector<8x8xbf16>
    %c0_39 = arith.constant 0 : index
    %c3 = arith.constant 3 : index
    %c0_40 = arith.constant 0 : index
    %c0_41 = arith.constant 0 : index
    %106 = vector.load %arg9[%c0_39, %c3, %c0_40, %c0_41] : memref<1x4x8x8xbf16, #tpu.memory_space<vmem>>, vector<1x1x8x8xbf16>
    %107 = vector.shape_cast %106 : vector<1x1x8x8xbf16> to vector<8x8xbf16>
    %108 = vector.shape_cast %105 : vector<8x8xbf16> to vector<1x1x8x8xbf16>
    tpu.vector_store %arg9[%c0_39, %c3, %c0_40, %c0_41], %108 {strides = array<i32>} : memref<1x4x8x8xbf16, #tpu.memory_space<vmem>>, vector<1x1x8x8xbf16>,
    %109 = arith.truncf %104 : vector<8x8xf32> to vector<8x8xbf16>
    %cst_42 = arith.constant dense<0.000000e+00> : vector<8x8xf32>
    %110 = tpu.matmul %109, %91, %cst_42 {dimension_numbers = #tpu.dot_dimension_numbers<[1], [0], [0], [1], [0, 0, 1, 1], [], []>} : vector<8x8xbf16>, vector<8x8xbf16>, vector<8x8xf32> -> vector<8x8xf32>
    %c0_43 = arith.constant 0 : index
    %c24 = arith.constant 24 : index
    %111 = vector.load %arg10[%c0_43, %c24] : memref<8x32xf32, #tpu.memory_space<vmem>>, vector<8x8xf32>
    tpu.vector_store %arg10[%c0_43, %c24], %110 {strides = array<i32>} : memref<8x32xf32, #tpu.memory_space<vmem>>, vector<8x8xf32>,
    %c0_44 = arith.constant 0 : index
    %c0_45 = arith.constant 0 : index
    %112 = vector.load %arg10[%c0_44, %c0_45] : memref<8x32xf32, #tpu.memory_space<vmem>>, vector<8x32xf32>
    %113 = arith.truncf %112 : vector<8x32xf32> to vector<8x32xbf16>
    %c0_46 = arith.constant 0 : index
    %c0_47 = arith.constant 0 : index
    %114 = vector.load %arg4[%c0_46, %c0_47] : memref<32x32xbf16, #tpu.memory_space<vmem>>, vector<32x32xbf16>
    %cst_48 = arith.constant dense<0.000000e+00> : vector<8x32xf32>
    %115 = tpu.matmul %113, %114, %cst_48 {dimension_numbers = #tpu.dot_dimension_numbers<[1], [0], [0], [1], [0, 0, 1, 1], [], []>} : vector<8x32xbf16>, vector<32x32xbf16>, vector<8x32xf32> -> vector<8x32xf32>
    %c0_49 = arith.constant 0 : index
    %c0_50 = arith.constant 0 : index
    %116 = vector.load %arg5[%c0_49, %c0_50] : memref<1x32xf32, #tpu.memory_space<vmem>>, vector<1x32xf32>
    %117 = vector.broadcast %116 : vector<1x32xf32> to vector<8x32xf32>
    %118 = arith.addf %115, %117 : vector<8x32xf32>
    %119 = arith.addf %1, %118 : vector<8x32xf32>
    %cst_51 = arith.constant dense<0.000000e+00> : vector<8xf32>
    %120 = vector.multi_reduction <add>, %119, %cst_51 [1] : vector<8x32xf32> to vector<8xf32>
    %121 = vector.shape_cast %120 : vector<8xf32> to vector<8x1xf32>
    %cst_52 = arith.constant 3.200000e+01 : f32
    %122 = vector.broadcast %cst_52 : f32 to vector<8x1xf32>
    %123 = arith.divf %121, %122 : vector<8x1xf32>
    %124 = vector.broadcast %123 : vector<8x1xf32> to vector<8x32xf32>
    %125 = arith.subf %119, %124 : vector<8x32xf32>
    %126 = vector.broadcast %123 : vector<8x1xf32> to vector<8x32xf32>
    %127 = arith.subf %119, %126 : vector<8x32xf32>
    %128 = arith.mulf %125, %127 : vector<8x32xf32>
    %cst_53 = arith.constant dense<0.000000e+00> : vector<8xf32>
    %129 = vector.multi_reduction <add>, %128, %cst_53 [1] : vector<8x32xf32> to vector<8xf32>
    %130 = vector.shape_cast %129 : vector<8xf32> to vector<8x1xf32>
    %cst_54 = arith.constant 3.200000e+01 : f32
    %131 = vector.broadcast %cst_54 : f32 to vector<8x1xf32>
    %132 = arith.divf %130, %131 : vector<8x1xf32>
    %133 = vector.broadcast %123 : vector<8x1xf32> to vector<8x32xf32>
    %134 = arith.subf %119, %133 : vector<8x32xf32>
    %cst_55 = arith.constant 9.99999974E-6 : f32
    %135 = vector.broadcast %cst_55 : f32 to vector<8x1xf32>
    %136 = arith.addf %132, %135 : vector<8x1xf32>
    %137 = math.rsqrt %136 : vector<8x1xf32>
    %138 = vector.broadcast %137 : vector<8x1xf32> to vector<8x32xf32>
    %139 = arith.mulf %134, %138 : vector<8x32xf32>
    %c0_56 = arith.constant 0 : index
    %c0_57 = arith.constant 0 : index
    %140 = vector.load %arg6[%c0_56, %c0_57] : memref<1x32xf32, #tpu.memory_space<vmem>>, vector<1x32xf32>
    %141 = vector.broadcast %140 : vector<1x32xf32> to vector<8x32xf32>
    %142 = arith.mulf %139, %141 : vector<8x32xf32>
    %c0_58 = arith.constant 0 : index
    %c0_59 = arith.constant 0 : index
    %143 = vector.load %arg7[%c0_58, %c0_59] : memref<1x32xf32, #tpu.memory_space<vmem>>, vector<1x32xf32>
    %144 = vector.broadcast %143 : vector<1x32xf32> to vector<8x32xf32>
    %145 = arith.addf %142, %144 : vector<8x32xf32>
    %c0_60 = arith.constant 0 : index
    %c0_61 = arith.constant 0 : index
    %c0_62 = arith.constant 0 : index
    %146 = vector.load %arg8[%c0_60, %c0_61, %c0_62] : memref<1x8x32xf32, #tpu.memory_space<vmem>>, vector<1x8x32xf32>
    %147 = vector.shape_cast %146 : vector<1x8x32xf32> to vector<8x32xf32>
    %148 = vector.shape_cast %145 : vector<8x32xf32> to vector<1x8x32xf32>
    tpu.vector_store %arg8[%c0_60, %c0_61, %c0_62], %148 {strides = array<i32>} : memref<1x8x32xf32, #tpu.memory_space<vmem>>, vector<1x8x32xf32>,
    return
  }
  func.func @transform_0(%arg0: i32) -> (i32, i32, i32) {
    %c0_i32 = arith.constant 0 : i32
    %c0_i32_0 = arith.constant 0 : i32
    %c0_i32_1 = arith.constant 0 : i32
    return %arg0, %c0_i32, %c0_i32_0 : i32, i32, i32
  }
  func.func @transform_1(%arg0: i32) -> (i32, i32) {
    %c0_i32 = arith.constant 0 : i32
    %c0_i32_0 = arith.constant 0 : i32
    %c0_i32_1 = arith.constant 0 : i32
    return %c0_i32, %c0_i32_0 : i32, i32
  }
  func.func @transform_2(%arg0: i32) -> (i32, i32) {
    %c0_i32 = arith.constant 0 : i32
    %c0_i32_0 = arith.constant 0 : i32
    %c0_i32_1 = arith.constant 0 : i32
    return %c0_i32, %c0_i32_0 : i32, i32
  }
  func.func @transform_3(%arg0: i32) -> (i32, i32) {
    %c0_i32 = arith.constant 0 : i32
    %c0_i32_0 = arith.constant 0 : i32
    %c0_i32_1 = arith.constant 0 : i32
    return %c0_i32, %c0_i32_0 : i32, i32
  }
  func.func @transform_4(%arg0: i32) -> (i32, i32) {
    %c0_i32 = arith.constant 0 : i32
    %c0_i32_0 = arith.constant 0 : i32
    %c0_i32_1 = arith.constant 0 : i32
    return %c0_i32, %c0_i32_0 : i32, i32
  }
  func.func @transform_5(%arg0: i32) -> (i32, i32) {
    %c0_i32 = arith.constant 0 : i32
    %c0_i32_0 = arith.constant 0 : i32
    %c0_i32_1 = arith.constant 0 : i32
    return %c0_i32, %c0_i32_0 : i32, i32
  }
  func.func @transform_6(%arg0: i32) -> (i32, i32) {
    %c0_i32 = arith.constant 0 : i32
    %c0_i32_0 = arith.constant 0 : i32
    %c0_i32_1 = arith.constant 0 : i32
    return %c0_i32, %c0_i32_0 : i32, i32
  }
  func.func @transform_7(%arg0: i32) -> (i32, i32, i32) {
    %c0_i32 = arith.constant 0 : i32
    %c0_i32_0 = arith.constant 0 : i32
    %c0_i32_1 = arith.constant 0 : i32
    return %arg0, %c0_i32, %c0_i32_0 : i32, i32, i32
  }
  func.func @transform_8(%arg0: i32) -> (i32, i32, i32, i32) {
    %c0_i32 = arith.constant 0 : i32
    %c0_i32_0 = arith.constant 0 : i32
    %c0_i32_1 = arith.constant 0 : i32
    %c0_i32_2 = arith.constant 0 : i32
    return %arg0, %c0_i32, %c0_i32_0, %c0_i32_1 : i32, i32, i32, i32
  }
}

</mosaic_0001>

<llo_original>
// kernel: tpu_custom_call.1
$region0: #{tpu_custom_call.1}
  #allocation0 [shape = 'u32[]', space=smem, size = 0x4, offset = 0x4, fixed_abs, tag = 'smem constant byte address 0x4 - core index']
  #allocation1 [shape = 'u32[144,128]{1,0:T(1,128)}', space=vmem, size = 0x12000, scoped, tag = 'internal scratch']
  #allocation2 [shape = 'f32[8,32]{1,0:T(8,128)}', space=vmem, size = 0x1000, scoped, tag = 'scratch operand']
  %s0 = inlined_call_operand.hbm [shape: f32[2,8,32], index: 0, kind: input, shape index: {}]
  %s1 = inlined_call_operand.hbm [shape: bf16[32,96], index: 1, kind: input, shape index: {}]
  %s2 = inlined_call_operand.vmem [shape: f32[1,96], index: 2, kind: input, shape index: {}]
  %s3 = inlined_call_operand.hbm [shape: bf16[32,32], index: 3, kind: input, shape index: {}]
  %s4 = inlined_call_operand.vmem [shape: f32[1,32], index: 4, kind: input, shape index: {}]
  %s5 = inlined_call_operand.vmem [shape: f32[1,32], index: 5, kind: input, shape index: {}]
  %s6 = inlined_call_operand.vmem [shape: f32[1,32], index: 6, kind: input, shape index: {}]
  %s7 = inlined_call_operand.hbm [shape: f32[2,8,32], index: 7, kind: output, shape index: {0}]
  %s8 = inlined_call_operand.hbm [shape: bf16[2,4,8,8], index: 8, kind: output, shape index: {1}]
  %9 = xla_tuple %s7, %s8
  %s10 = sld [smem:[#allocation0]]
  $region81: #{tpu_custom_call.1} parent=0
    _
  %s12 = ssub.s32 1, %s10
  %s13 = scalar_select 0, %s12, %s10
  $region1: #{tpu_custom_call.1} parent=0
    #allocation3 [shape = 'u8[8192]{0}', space=vmem, size = 0x2000, scoped, tag = 'input window, operand 0']
    #allocation4 [shape = 's32[2]{0}', space=sflag, size = 0x8, scoped, tag = 'scoped memory for tpu_custom_call.1']
    #allocation5 [shape = 's32[2]{0}', space=sflag, size = 0x8, scoped, tag = 'scoped memory for tpu_custom_call.1']
    #allocation6 [shape = 'u8[8192]{0}', space=vmem, size = 0x2000, scoped, tag = 'input window, operand 1, single buffered']
    #allocation7 [shape = 's32[1]{0}', space=sflag, size = 0x4, scoped, tag = 'scoped memory for tpu_custom_call.1']
    #allocation8 [shape = 'u8[8192]{0}', space=vmem, size = 0x2000, scoped, tag = 'input window, operand 3, single buffered']
    #allocation9 [shape = 'u8[8192]{0}', space=vmem, size = 0x2000, scoped, tag = 'output window, operand 0']
    #allocation10 [shape = 'u8[16384]{0}', space=vmem, size = 0x4000, scoped, tag = 'output window, operand 1']
    #allocation11 [shape = 's32[2]{0}', space=sflag, size = 0x8, scoped, tag = 'scoped memory for tpu_custom_call.1']
    %14 = vsyncpa [#allocation4], 0
    %s15 = scalar_lea.sflag [#allocation4], 1
    %16 = vsyncpa %s15, 0
    %17 = vsyncpa [#allocation7], 0
    %18 = vsyncpa [#allocation5], 0
    %s19 = scalar_lea.sflag [#allocation5], 1
    %20 = vsyncpa %s19, 0
    %21 = vsyncpa [#allocation11], 0
    %s22 = scalar_lea.sflag [#allocation11], 1
    %23 = vsyncpa %s22, 0
    loop: start=0, step=1, limit=4
    $region2: #{tpu_custom_call.1} parent=1 // loop_pre_header
      _
    $region3: #{tpu_custom_call.1} parent=1 // loop_header
      %s25 = sphi 0, %s29
      %p26 = scmp.ge.s32.totalorder %s25, 4
      %s35 = sphi 0, %s37
      %s38 = sphi 0, %s35
      %s39 = sphi 0, %s38
      %s55 = sphi 0, %s39
      %s59 = sphi 0, %s59
      %s61 = sphi 0, %s59
      %s62 = sphi 0, %s61
      %s76 = sphi 0, %s62
      %s80 = sphi 0, %s80
      %s82 = sphi 0, %s80
      %s83 = sphi 0, %s82
      %s97 = sphi 0, %s83
      %s101 = sphi 0, %s101
      %s103 = sphi 0, %s101
      %s104 = sphi 0, %s103
      %s118 = sphi 0, %s104
      %s122 = sphi 0, %s122
      %s124 = sphi 0, %s122
      %s125 = sphi 0, %s124
      %s139 = sphi 0, %s125
      %s143 = sphi 0, %s143
      %s145 = sphi 0, %s143
      %s146 = sphi 0, %s145
      %s160 = sphi 0, %s146
      %s164 = sphi 0, %s164
      %s166 = sphi 0, %s164
      %s167 = sphi 0, %s166
      %s181 = sphi 0, %s167
      %s187 = sphi 0, %s189
      %s190 = sphi 0, %s187
      %s191 = sphi 0, %s190
      %s207 = sphi 0, %s191
      %s213 = sphi 0, %s215
      %s216 = sphi 0, %s213
      %s217 = sphi 0, %s216
      %s233 = sphi 0, %s217
    $region4: #{tpu_custom_call.1} parent=1 // loop_header_branch
      %28 = sbr.rel (%p26) target = $region8
    $region5: #{tpu_custom_call.1} parent=1 // loop_body
      %s30 = ssub.s32 %s25, 1
      %s31 = ssub.s32 %s25, 2
      %s32 = sadd.s32 %s25, 1
      %s33 = ssub.s32 %s25, %s32
      %p34 = scmp.eq.s32.totalorder %s33, 0
      %s36 = sadd.s32 %s35, 1
      %s37 = scalar_select %p34, %s35, %s36
      %p40 = pneg %p34
      %p41 = scmp.eq.s32.totalorder %s25, 1
      %p42 = por %p40, %p41
      %p43 = scmp.ne.s32.totalorder %s35, %s38
      %p44 = scmp.eq.s32.totalorder %s25, 0
      %p45 = por %p43, %p44
      %p46 = scmp.ne.s32.totalorder %s35, %s38
      %p47 = scmp.eq.s32.totalorder %s30, 1
      %p48 = por %p46, %p47
      %p49 = scmp.ne.s32.totalorder %s38, %s39
      %p50 = scmp.eq.s32.totalorder %s30, 0
      %p51 = por %p49, %p50
      %p52 = scmp.ne.s32.totalorder %s38, %s39
      %p53 = scmp.eq.s32.totalorder %s31, 1
      %p54 = por %p52, %p53
      %p56 = scmp.ne.s32.totalorder %s39, %s55
      %p57 = scmp.eq.s32.totalorder %s31, 0
      %p58 = por %p56, %p57
      %s60 = sadd.s32 %s59, 1
      %p63 = scmp.eq.s32.totalorder %s25, 1
      %p64 = scmp.ne.s32.totalorder %s59, %s61
      %p65 = scmp.eq.s32.totalorder %s25, 0
      %p66 = por %p64, %p65
      %p67 = scmp.ne.s32.totalorder %s59, %s61
      %p68 = scmp.eq.s32.totalorder %s30, 1
      %p69 = por %p67, %p68
      %p70 = scmp.ne.s32.totalorder %s61, %s62
      %p71 = scmp.eq.s32.totalorder %s30, 0
      %p72 = por %p70, %p71
      %p73 = scmp.ne.s32.totalorder %s61, %s62
      %p74 = scmp.eq.s32.totalorder %s31, 1
      %p75 = por %p73, %p74
      %p77 = scmp.ne.s32.totalorder %s62, %s76
      %p78 = scmp.eq.s32.totalorder %s31, 0
      %p79 = por %p77, %p78
      %s81 = sadd.s32 %s80, 1
      %p84 = scmp.eq.s32.totalorder %s25, 1
      %p85 = scmp.ne.s32.totalorder %s80, %s82
      %p86 = scmp.eq.s32.totalorder %s25, 0
      %p87 = por %p85, %p86
      %p88 = scmp.ne.s32.totalorder %s80, %s82
      %p89 = scmp.eq.s32.totalorder %s30, 1
      %p90 = por %p88, %p89
      %p91 = scmp.ne.s32.totalorder %s82, %s83
      %p92 = scmp.eq.s32.totalorder %s30, 0
      %p93 = por %p91, %p92
      %p94 = scmp.ne.s32.totalorder %s82, %s83
      %p95 = scmp.eq.s32.totalorder %s31, 1
      %p96 = por %p94, %p95
      %p98 = scmp.ne.s32.totalorder %s83, %s97
      %p99 = scmp.eq.s32.totalorder %s31, 0
      %p100 = por %p98, %p99
      %s102 = sadd.s32 %s101, 1
      %p105 = scmp.eq.s32.totalorder %s25, 1
      %p106 = scmp.ne.s32.totalorder %s101, %s103
      %p107 = scmp.eq.s32.totalorder %s25, 0
      %p108 = por %p106, %p107
      %p109 = scmp.ne.s32.totalorder %s101, %s103
      %p110 = scmp.eq.s32.totalorder %s30, 1
      %p111 = por %p109, %p110
      %p112 = scmp.ne.s32.totalorder %s103, %s104
      %p113 = scmp.eq.s32.totalorder %s30, 0
      %p114 = por %p112, %p113
      %p115 = scmp.ne.s32.totalorder %s103, %s104
      %p116 = scmp.eq.s32.totalorder %s31, 1
      %p117 = por %p115, %p116
      %p119 = scmp.ne.s32.totalorder %s104, %s118
      %p120 = scmp.eq.s32.totalorder %s31, 0
      %p121 = por %p119, %p120
      %s123 = sadd.s32 %s122, 1
      %p126 = scmp.eq.s32.totalorder %s25, 1
      %p127 = scmp.ne.s32.totalorder %s122, %s124
      %p128 = scmp.eq.s32.totalorder %s25, 0
      %p129 = por %p127, %p128
      %p130 = scmp.ne.s32.totalorder %s122, %s124
      %p131 = scmp.eq.s32.totalorder %s30, 1
      %p132 = por %p130, %p131
      %p133 = scmp.ne.s32.totalorder %s124, %s125
      %p134 = scmp.eq.s32.totalorder %s30, 0
      %p135 = por %p133, %p134
      %p136 = scmp.ne.s32.totalorder %s124, %s125
      %p137 = scmp.eq.s32.totalorder %s31, 1
      %p138 = por %p136, %p137
      %p140 = scmp.ne.s32.totalorder %s125, %s139
      %p141 = scmp.eq.s32.totalorder %s31, 0
      %p142 = por %p140, %p141
      %s144 = sadd.s32 %s143, 1
      %p147 = scmp.eq.s32.totalorder %s25, 1
      %p148 = scmp.ne.s32.totalorder %s143, %s145
      %p149 = scmp.eq.s32.totalorder %s25, 0
      %p150 = por %p148, %p149
      %p151 = scmp.ne.s32.totalorder %s143, %s145
      %p152 = scmp.eq.s32.totalorder %s30, 1
      %p153 = por %p151, %p152
      %p154 = scmp.ne.s32.totalorder %s145, %s146
      %p155 = scmp.eq.s32.totalorder %s30, 0
      %p156 = por %p154, %p155
      %p157 = scmp.ne.s32.totalorder %s145, %s146
      %p158 = scmp.eq.s32.totalorder %s31, 1
      %p159 = por %p157, %p158
      %p161 = scmp.ne.s32.totalorder %s146, %s160
      %p162 = scmp.eq.s32.totalorder %s31, 0
      %p163 = por %p161, %p162
      %s165 = sadd.s32 %s164, 1
      %p168 = scmp.eq.s32.totalorder %s25, 1
      %p169 = scmp.ne.s32.totalorder %s164, %s166
      %p170 = scmp.eq.s32.totalorder %s25, 0
      %p171 = por %p169, %p170
      %p172 = scmp.ne.s32.totalorder %s164, %s166
      %p173 = scmp.eq.s32.totalorder %s30, 1
      %p174 = por %p172, %p173
      %p175 = scmp.ne.s32.totalorder %s166, %s167
      %p176 = scmp.eq.s32.totalorder %s30, 0
      %p177 = por %p175, %p176
      %p178 = scmp.ne.s32.totalorder %s166, %s167
      %p179 = scmp.eq.s32.totalorder %s31, 1
      %p180 = por %p178, %p179
      %p182 = scmp.ne.s32.totalorder %s167, %s181
      %p183 = scmp.eq.s32.totalorder %s31, 0
      %p184 = por %p182, %p183
      %s185 = ssub.s32 %s25, %s32
      %p186 = scmp.eq.s32.totalorder %s185, 0
      %s188 = sadd.s32 %s187, 1
      %s189 = scalar_select %p186, %s187, %s188
      %p192 = pneg %p186
      %p193 = scmp.eq.s32.totalorder %s25, 1
      %p194 = por %p192, %p193
      %p195 = scmp.ne.s32.totalorder %s187, %s190
      %p196 = scmp.eq.s32.totalorder %s25, 0
      %p197 = por %p195, %p196
      %p198 = scmp.ne.s32.totalorder %s187, %s190
      %p199 = scmp.eq.s32.totalorder %s30, 1
      %p200 = por %p198, %p199
      %p201 = scmp.ne.s32.totalorder %s190, %s191
      %p202 = scmp.eq.s32.totalorder %s30, 0
      %p203 = por %p201, %p202
      %p204 = scmp.ne.s32.totalorder %s190, %s191
      %p205 = scmp.eq.s32.totalorder %s31, 1
      %p206 = por %p204, %p205
      %p208 = scmp.ne.s32.totalorder %s191, %s207
      %p209 = scmp.eq.s32.totalorder %s31, 0
      %p210 = por %p208, %p209
      %s211 = ssub.s32 %s25, %s32
      %p212 = scmp.eq.s32.totalorder %s211, 0
      %s214 = sadd.s32 %s213, 1
      %s215 = scalar_select %p212, %s213, %s214
      %p218 = pneg %p212
      %p219 = scmp.eq.s32.totalorder %s25, 1
      %p220 = por %p218, %p219
      %p221 = scmp.ne.s32.totalorder %s213, %s216
      %p222 = scmp.eq.s32.totalorder %s25, 0
      %p223 = por %p221, %p222
      %p224 = scmp.ne.s32.totalorder %s213, %s216
      %p225 = scmp.eq.s32.totalorder %s30, 1
      %p226 = por %p224, %p225
      %p227 = scmp.ne.s32.totalorder %s216, %s217
      %p228 = scmp.eq.s32.totalorder %s30, 0
      %p229 = por %p227, %p228
      %p230 = scmp.ne.s32.totalorder %s216, %s217
      %p231 = scmp.eq.s32.totalorder %s31, 1
      %p232 = por %p230, %p231
      %p234 = scmp.ne.s32.totalorder %s217, %s233
      %p235 = scmp.eq.s32.totalorder %s31, 0
      %p236 = por %p234, %p235
      %p237 = scmp.le.s32.totalorder 1, %s25
      %p238 = scmp.lt.s32.totalorder %s25, 3
      %p239 = pnand %p237, %p238
      %p240 = pneg %p239
      // Predicated region
      $region9: #{tpu_custom_call.1} parent=5 // pred_check
        _
      $region10: #{tpu_custom_call.1} parent=5 // pred_check_branch
        %242 = sbr.rel (%p239) target = $region12
      $region11: #{tpu_custom_call.1} parent=5 // pred_region
        %s243 = ssub.s32 %s25, 1
        // Predicated region
        $region13: #{tpu_custom_call.1} parent=11 // pred_check
          %p244 = pneg %p72
        $region14: #{tpu_custom_call.1} parent=11 // pred_check_branch
          %246 = sbr.rel (%p244) target = $region16
        $region15: #{tpu_custom_call.1} parent=11 // pred_region
          %s248 = ssub.s32 256, 256
          %249 = vsyncadd [#allocation7], %s248
          %s250 = sshll.u32 [#allocation6], 4
          %s251 = int_to_ptr.vmem [resolvable:$true] %s250
          %256 = dma.hbm_to_vmem [thread:$0]  %s1, 256, %s251, [#allocation7], 64, 64, 4
        $region16: #{tpu_custom_call.1} parent=11 // pred_fallthru
          _
        // Predicated region
        $region17: #{tpu_custom_call.1} parent=11 // pred_check
          %p257 = pneg %p93
        $region18: #{tpu_custom_call.1} parent=11 // pred_check_branch
          %259 = sbr.rel (%p257) target = $region20
        $region19: #{tpu_custom_call.1} parent=11 // pred_region
          _
        $region20: #{tpu_custom_call.1} parent=11 // pred_fallthru
          _
        // Predicated region
        $region21: #{tpu_custom_call.1} parent=11 // pred_check
          %p260 = pneg %p114
        $region22: #{tpu_custom_call.1} parent=11 // pred_check_branch
          %262 = sbr.rel (%p260) target = $region24
        $region23: #{tpu_custom_call.1} parent=11 // pred_region
          %s264 = ssub.s32 256, 256
          %265 = vsyncadd [#allocation7], %s264
          %s266 = sshll.u32 [#allocation8], 4
          %s267 = int_to_ptr.vmem [resolvable:$true] %s266
          %272 = dma.hbm_to_vmem [thread:$0]  %s3, 256, %s267, [#allocation7], 64, 64, 4
        $region24: #{tpu_custom_call.1} parent=11 // pred_fallthru
          _
        // Predicated region
        $region25: #{tpu_custom_call.1} parent=11 // pred_check
          %p273 = pneg %p135
        $region26: #{tpu_custom_call.1} parent=11 // pred_check_branch
          %275 = sbr.rel (%p273) target = $region28
        $region27: #{tpu_custom_call.1} parent=11 // pred_region
          _
        $region28: #{tpu_custom_call.1} parent=11 // pred_fallthru
          _
        // Predicated region
        $region29: #{tpu_custom_call.1} parent=11 // pred_check
          %p276 = pneg %p156
        $region30: #{tpu_custom_call.1} parent=11 // pred_check_branch
          %278 = sbr.rel (%p276) target = $region32
        $region31: #{tpu_custom_call.1} parent=11 // pred_region
          _
        $region32: #{tpu_custom_call.1} parent=11 // pred_fallthru
          _
        // Predicated region
        $region33: #{tpu_custom_call.1} parent=11 // pred_check
          %p279 = pneg %p177
        $region34: #{tpu_custom_call.1} parent=11 // pred_check_branch
          %281 = sbr.rel (%p279) target = $region36
        $region35: #{tpu_custom_call.1} parent=11 // pred_region
          _
        $region36: #{tpu_custom_call.1} parent=11 // pred_fallthru
          _
      $region12: #{tpu_custom_call.1} parent=5 // pred_fallthru
        _
      %p282 = scmp.lt.s32.totalorder %s25, 2
      // Predicated region
      $region37: #{tpu_custom_call.1} parent=5 // pred_check
        %p283 = pneg %p282
      $region38: #{tpu_custom_call.1} parent=5 // pred_check_branch
        %285 = sbr.rel (%p283) target = $region40
      $region39: #{tpu_custom_call.1} parent=5 // pred_region
        // Predicated region
        $region41: #{tpu_custom_call.1} parent=39 // pred_check
          %p286 = pneg %p45
        $region42: #{tpu_custom_call.1} parent=39 // pred_check_branch
          %288 = sbr.rel (%p286) target = $region44
        $region43: #{tpu_custom_call.1} parent=39 // pred_region
          %s289 = sand.u32 %s35, 1
          %s290 = scalar_lea.sflag [#allocation4], %s289
          %s291 = sand.u32 %s35, 1
          %s292 = smul.addr %s291, 8
          %s293 = scalar_lea.vmem [#allocation3], %s292
          %s295 = ssub.s32 128, 128
          %296 = vsyncadd %s290, %s295
          %s297 = smul.addr %s25, 128
          %s298 = scalar_lea.hbm %s0, %s297
          %s300 = sshll.u32 %s293, 4
          %s301 = int_to_ptr.vmem [resolvable:$true] %s300
          %303 = dma.hbm_to_vmem [thread:$0]  %s298, 128, %s301, %s290
        $region44: #{tpu_custom_call.1} parent=39 // pred_fallthru
          _
      $region40: #{tpu_custom_call.1} parent=5 // pred_fallthru
        _
      %p304 = scmp.le.s32.totalorder 1, %s25
      %p305 = scmp.lt.s32.totalorder %s25, 3
      %p306 = pnand %p304, %p305
      %p307 = pneg %p306
      // Predicated region
      $region45: #{tpu_custom_call.1} parent=5 // pred_check
        _
      $region46: #{tpu_custom_call.1} parent=5 // pred_check_branch
        %309 = sbr.rel (%p306) target = $region48
      $region47: #{tpu_custom_call.1} parent=5 // pred_region
        %s310 = ssub.s32 %s25, 1
        %s311 = sand.u32 %s38, 1
        %s312 = scalar_lea.sflag [#allocation4], %s311
        %s313 = sand.u32 %s38, 1
        %s314 = smul.addr %s313, 8
        %s315 = scalar_lea.vmem [#allocation3], %s314
        // Predicated region
        $region49: #{tpu_custom_call.1} parent=47 // pred_check
          %p316 = pneg %p51
        $region50: #{tpu_custom_call.1} parent=47 // pred_check_branch
          %318 = sbr.rel (%p316) target = $region52
        $region51: #{tpu_custom_call.1} parent=47 // pred_region
          %319 = dma.done %s312, 128
        $region52: #{tpu_custom_call.1} parent=47 // pred_fallthru
          _
        // Predicated region
        $region53: #{tpu_custom_call.1} parent=47 // pred_check
          %p320 = pneg %p72
        $region54: #{tpu_custom_call.1} parent=47 // pred_check_branch
          %322 = sbr.rel (%p320) target = $region56
        $region55: #{tpu_custom_call.1} parent=47 // pred_region
          %323 = dma.done [#allocation7], 256
        $region56: #{tpu_custom_call.1} parent=47 // pred_fallthru
          _
        // Predicated region
        $region57: #{tpu_custom_call.1} parent=47 // pred_check
          %p324 = pneg %p114
        $region58: #{tpu_custom_call.1} parent=47 // pred_check_branch
          %326 = sbr.rel (%p324) target = $region60
        $region59: #{tpu_custom_call.1} parent=47 // pred_region
          %327 = dma.done [#allocation7], 256
        $region60: #{tpu_custom_call.1} parent=47 // pred_fallthru
          _
        %s328 = sand.u32 %s38, 1
        %s329 = scalar_lea.sflag [#allocation4], %s328
        %s330 = sand.u32 %s38, 1
        %s331 = smul.addr %s330, 8
        %s332 = scalar_lea.vmem [#allocation3], %s331
        %p333 = pneg %p51
        %p334 = pneg %p48
        %p335 = pneg %p72
        %p336 = pneg %p69
        %p337 = pneg %p93
        %p338 = pneg %p90
        %p339 = pneg %p114
        %p340 = pneg %p111
        %p341 = pneg %p135
        %p342 = pneg %p132
        %p343 = pneg %p156
        %p344 = pneg %p153
        %p345 = pneg %p177
        %p346 = pneg %p174
        %p347 = pneg %p203
        %p348 = pneg %p200
        %s349 = sand.u32 %s190, 1
        %s350 = scalar_lea.sflag [#allocation5], %s349
        %s351 = sand.u32 %s190, 1
        %s352 = smul.addr %s351, 8
        %s353 = scalar_lea.vmem [#allocation9], %s352
        %p354 = pneg %p229
        %p355 = pneg %p226
        %s356 = sand.u32 %s216, 1
        %s357 = scalar_lea.sflag [#allocation11], %s356
        %s358 = sand.u32 %s216, 1
        %s359 = smul.addr %s358, 16
        %s360 = scalar_lea.vmem [#allocation10], %s359
        %v362 = vld [vmem:[%s315] sm:$0xff]
        %v363 = vpack.c.bf16 %v362, %v362
        %v364 = vld [vmem:[#allocation6] sm:$0xf]
        %v365 = vld [vmem:[#allocation6 + $0x4] sm:$0xf]
        %v366 = vld [vmem:[#allocation6 + $0x8] sm:$0xf]
        %v367 = vld [vmem:[#allocation6 + $0xc] sm:$0xf]
        %v368 = vld [vmem:[%s2] sm:$0x1]
        %v370 = vlaneseq
        %v371 = vshrl.u32 %v370, 7
        %v372 = vsub.s32 0, %v371
        %v373 = vrot.slane %v368, %v372
        %v379 = vunpack.c.l.b16 %v364
        %v380 = vunpack.c.l.b16 %v365
        %v381 = vunpack.c.l.b16 %v366
        %v382 = vunpack.c.l.b16 %v367
        %v383 = vpack.c.b16 %v380, %v379
        %v384 = vpack.c.b16 %v382, %v381
        %vm387 = vcmask 261120
        %v389 = vsel %vm387, %v363, 0
        %391 = vmatprep.subr.bf16.mxu0 0
        %392 = vmatpush1.bf16.msra.mxu0 0
        %393 = vmatprep.subr.bf16.mxu0 0
        %394 = vmatpush1.bf16.msra.mxu0 0
        %395 = vmatprep.subr.bf16.mxu0 0
        %396 = vmatpush1.bf16.msra.mxu0 0
        %397 = vmatprep.subr.bf16.mxu0 0
        %398 = vmatpush1.bf16.msra.mxu0 0
        %399 = vmatprep.subr.bf16.mxu0 0
        %400 = vmatpush1.bf16.msra.mxu0 0
        %401 = vmatprep.subr.bf16.mxu0 0
        %402 = vmatpush1.bf16.msra.mxu0 0
        %403 = vmatprep.subr.bf16.mxu0 0
        %404 = vmatpush1.bf16.msra.mxu0 %v384
        %405 = vmatprep.subr.bf16.mxu0 0
        %406 = vmatpush1.bf16.msra.mxu0 %v383
        %407 = vmatprep.subr.bf16.mxu0 0
        %408 = vmatpush2.bf16.msra.mxu0 0
        %409 = vmatprep.subr.bf16.mxu0 0
        %410 = vmatpush2.bf16.msra.mxu0 0
        %411 = vmatprep.subr.bf16.mxu0 0
        %412 = vmatpush2.bf16.msra.mxu0 0
        %413 = vmatprep.subr.bf16.mxu0 0
        %414 = vmatpush2.bf16.msra.mxu0 0
        %415 = vmatprep.subr.bf16.mxu0 0
        %416 = vmatpush2.bf16.msra.mxu0 0
        %417 = vmatprep.subr.bf16.mxu0 0
        %418 = vmatpush2.bf16.msra.mxu0 0
        %419 = vmatprep.subr.bf16.mxu0 0
        %420 = vmatpush2.bf16.msra.mxu0 0
        %421 = vmatprep.subr.bf16.mxu0 0
        %422 = vmatpush2.bf16.msra.mxu0 0
        %423 = vmatprep.mubr.bf16.mxu0 0
        %424 = vmatmul.mubr.bf16.gmra.mxu0 %v389
        %v425 = vpop.f32.mrf.mxu0
        %v426 = vadd.f32 %v373, %v425
        %v427 = vpop.f32.mrf.mxu0
        %v428 = vpop.f32.mrf.mxu0
        %v429 = vpop.f32.mrf.mxu0
        %430 = vdwg.mxu0
        %v431 = vpack.c.bf16 %v426, %v426
        %433 = vrot.lane.b32.xlu0 %v431, 96
        %v434 = vpop.permute.xlu0 %433
        %vm435 = vcmask 64512
        %v437 = vsel %vm435, %v431, 0
        %v440 = vsel %vm435, %v434, 0
        %442 = vmatprep.subr.bf16.mxu0 0
        %443 = vmatpush1.bf16.xpose.msra.mxu0 0
        %444 = vmatprep.subr.bf16.mxu0 0
        %445 = vmatpush1.bf16.xpose.msra.mxu0 0
        %446 = vmatprep.subr.bf16.mxu0 0
        %447 = vmatpush1.bf16.xpose.msra.mxu0 0
        %448 = vmatprep.subr.bf16.mxu0 0
        %449 = vmatpush1.bf16.xpose.msra.mxu0 0
        %450 = vmatprep.subr.bf16.mxu0 0
        %451 = vmatpush1.bf16.xpose.msra.mxu0 0
        %452 = vmatprep.subr.bf16.mxu0 0
        %453 = vmatpush1.bf16.xpose.msra.mxu0 0
        %454 = vmatprep.subr.bf16.mxu0 0
        %455 = vmatpush1.bf16.xpose.msra.mxu0 0
        %456 = vmatprep.subr.bf16.mxu0 0
        %457 = vmatpush1.bf16.xpose.msra.mxu0 %v440
        %458 = vmatprep.subr.bf16.mxu0 0
        %459 = vmatpush2.bf16.xpose.msra.mxu0 0
        %460 = vmatprep.subr.bf16.mxu0 0
        %461 = vmatpush2.bf16.xpose.msra.mxu0 0
        %462 = vmatprep.subr.bf16.mxu0 0
        %463 = vmatpush2.bf16.xpose.msra.mxu0 0
        %464 = vmatprep.subr.bf16.mxu0 0
        %465 = vmatpush2.bf16.xpose.msra.mxu0 0
        %466 = vmatprep.subr.bf16.mxu0 0
        %467 = vmatpush2.bf16.xpose.msra.mxu0 0
        %468 = vmatprep.subr.bf16.mxu0 0
        %469 = vmatpush2.bf16.xpose.msra.mxu0 0
        %470 = vmatprep.subr.bf16.mxu0 0
        %471 = vmatpush2.bf16.xpose.msra.mxu0 0
        %472 = vmatprep.subr.bf16.mxu0 0
        %473 = vmatpush2.bf16.xpose.msra.mxu0 0
        %474 = vmatprep.mubr.bf16.mxu0 0
        %475 = vmatmul.mubr.bf16.gmra.mxu0 %v437
        %v476 = vpop.f32.mrf.mxu0
        %v477 = vadd.f32 0.0, %v476
        %v478 = vpop.f32.mrf.mxu0
        %v479 = vpop.f32.mrf.mxu0
        %v480 = vpop.f32.mrf.mxu0
        %481 = vdwg.mxu0
        %v482 = vmul.f32 %v477, 0.35355338
        %v483 = vsel %vm435, %v482, -inf
        %484 = vmax.xlane.f32.xlu0 %v483
        %v485 = vpop.xlane.xlu0 %484
        %v486 = vsub.f32 %v482, %v485
        %v487 = vmul.f32 %v486, 1.442695
        %v488 = vpow.pop %v487
        %v489 = vsel %vm435, %v488, 0.0
        %490 = vadd.xlane.f32.xlu0 %v489
        %v491 = vpop.xlane.xlu0 %490
        %v492 = vrcp.pop %v491
        %v493 = vmul.f32 %v488, %v492
        %v494 = vpack.c.bf16 %v493, %v493
        %vm495 = vcmask 60416
        %496 = vst.msk [vmem:[%s360] sm:$0xf] %vm495, %v494
        %497 = vrot.lane.b32.xlu0 %v431, 64
        %v498 = vpop.permute.xlu0 %497
        %v500 = vsel %vm435, %v494, 0
        %vm502 = vcmask 1043456
        %v504 = vsel %vm502, %v498, 0
        %506 = vmatprep.subr.bf16.mxu0 0
        %507 = vmatpush1.bf16.msra.mxu0 0
        %508 = vmatprep.subr.bf16.mxu0 0
        %509 = vmatpush1.bf16.msra.mxu0 0
        %510 = vmatprep.subr.bf16.mxu0 0
        %511 = vmatpush1.bf16.msra.mxu0 0
        %512 = vmatprep.subr.bf16.mxu0 0
        %513 = vmatpush1.bf16.msra.mxu0 0
        %514 = vmatprep.subr.bf16.mxu0 0
        %515 = vmatpush1.bf16.msra.mxu0 0
        %516 = vmatprep.subr.bf16.mxu0 0
        %517 = vmatpush1.bf16.msra.mxu0 0
        %518 = vmatprep.subr.bf16.mxu0 0
        %519 = vmatpush1.bf16.msra.mxu0 0
        %520 = vmatprep.subr.bf16.mxu0 0
        %521 = vmatpush1.bf16.msra.mxu0 %v504
        %522 = vmatprep.subr.bf16.mxu0 0
        %523 = vmatpush2.bf16.msra.mxu0 0
        %524 = vmatprep.subr.bf16.mxu0 0
        %525 = vmatpush2.bf16.msra.mxu0 0
        %526 = vmatprep.subr.bf16.mxu0 0
        %527 = vmatpush2.bf16.msra.mxu0 0
        %528 = vmatprep.subr.bf16.mxu0 0
        %529 = vmatpush2.bf16.msra.mxu0 0
        %530 = vmatprep.subr.bf16.mxu0 0
        %531 = vmatpush2.bf16.msra.mxu0 0
        %532 = vmatprep.subr.bf16.mxu0 0
        %533 = vmatpush2.bf16.msra.mxu0 0
        %534 = vmatprep.subr.bf16.mxu0 0
        %535 = vmatpush2.bf16.msra.mxu0 0
        %536 = vmatprep.subr.bf16.mxu0 0
        %537 = vmatpush2.bf16.msra.mxu0 0
        %538 = vmatprep.mubr.bf16.mxu0 0
        %539 = vmatmul.mubr.bf16.gmra.mxu0 %v500
        %v540 = vpop.f32.mrf.mxu0
        %v541 = vadd.f32 0.0, %v540
        %v542 = vpop.f32.mrf.mxu0
        %v543 = vpop.f32.mrf.mxu0
        %v544 = vpop.f32.mrf.mxu0
        %545 = vdwg.mxu0
        %546 = vst.msk [vmem:[#allocation2] sm:$0xff] %vm435, %v541
        %547 = vrot.lane.b32.xlu0 %v431, 120
        %v548 = vpop.permute.xlu0 %547
        %549 = vrot.lane.b32.xlu0 %v431, 88
        %v550 = vpop.permute.xlu0 %549
        %v552 = vsel %vm435, %v548, 0
        %v555 = vsel %vm435, %v550, 0
        %557 = vmatprep.subr.bf16.mxu0 0
        %558 = vmatpush1.bf16.xpose.msra.mxu0 0
        %559 = vmatprep.subr.bf16.mxu0 0
        %560 = vmatpush1.bf16.xpose.msra.mxu0 0
        %561 = vmatprep.subr.bf16.mxu0 0
        %562 = vmatpush1.bf16.xpose.msra.mxu0 0
        %563 = vmatprep.subr.bf16.mxu0 0
        %564 = vmatpush1.bf16.xpose.msra.mxu0 0
        %565 = vmatprep.subr.bf16.mxu0 0
        %566 = vmatpush1.bf16.xpose.msra.mxu0 0
        %567 = vmatprep.subr.bf16.mxu0 0
        %568 = vmatpush1.bf16.xpose.msra.mxu0 0
        %569 = vmatprep.subr.bf16.mxu0 0
        %570 = vmatpush1.bf16.xpose.msra.mxu0 0
        %571 = vmatprep.subr.bf16.mxu0 0
        %572 = vmatpush1.bf16.xpose.msra.mxu0 %v555
        %573 = vmatprep.subr.bf16.mxu0 0
        %574 = vmatpush2.bf16.xpose.msra.mxu0 0
        %575 = vmatprep.subr.bf16.mxu0 0
        %576 = vmatpush2.bf16.xpose.msra.mxu0 0
        %577 = vmatprep.subr.bf16.mxu0 0
        %578 = vmatpush2.bf16.xpose.msra.mxu0 0
        %579 = vmatprep.subr.bf16.mxu0 0
        %580 = vmatpush2.bf16.xpose.msra.mxu0 0
        %581 = vmatprep.subr.bf16.mxu0 0
        %582 = vmatpush2.bf16.xpose.msra.mxu0 0
        %583 = vmatprep.subr.bf16.mxu0 0
        %584 = vmatpush2.bf16.xpose.msra.mxu0 0
        %585 = vmatprep.subr.bf16.mxu0 0
        %586 = vmatpush2.bf16.xpose.msra.mxu0 0
        %587 = vmatprep.subr.bf16.mxu0 0
        %588 = vmatpush2.bf16.xpose.msra.mxu0 0
        %589 = vmatprep.mubr.bf16.mxu0 0
        %590 = vmatmul.mubr.bf16.gmra.mxu0 %v552
        %v591 = vpop.f32.mrf.mxu0
        %v592 = vadd.f32 0.0, %v591
        %v593 = vpop.f32.mrf.mxu0
        %v594 = vpop.f32.mrf.mxu0
        %v595 = vpop.f32.mrf.mxu0
        %596 = vdwg.mxu0
        %v597 = vmul.f32 %v592, 0.35355338
        %v598 = vsel %vm435, %v597, -inf
        %599 = vmax.xlane.f32.xlu0 %v598
        %v600 = vpop.xlane.xlu0 %599
        %v601 = vsub.f32 %v597, %v600
        %v602 = vmul.f32 %v601, 1.442695
        %v603 = vpow.pop %v602
        %v604 = vsel %vm435, %v603, 0.0
        %605 = vadd.xlane.f32.xlu0 %v604
        %v606 = vpop.xlane.xlu0 %605
        %v607 = vrcp.pop %v606
        %v608 = vmul.f32 %v603, %v607
        %v609 = vpack.c.bf16 %v608, %v608
        %s610 = scalar_lea.vmem %s360, 4 [#allocation10]
        %611 = vst.msk [vmem:[%s610] sm:$0xf] %vm495, %v609
        %612 = vrot.lane.b32.xlu0 %v431, 56
        %v613 = vpop.permute.xlu0 %612
        %v615 = vsel %vm435, %v609, 0
        %v618 = vsel %vm502, %v613, 0
        %620 = vmatprep.subr.bf16.mxu0 0
        %621 = vmatpush1.bf16.msra.mxu0 0
        %622 = vmatprep.subr.bf16.mxu0 0
        %623 = vmatpush1.bf16.msra.mxu0 0
        %624 = vmatprep.subr.bf16.mxu0 0
        %625 = vmatpush1.bf16.msra.mxu0 0
        %626 = vmatprep.subr.bf16.mxu0 0
        %627 = vmatpush1.bf16.msra.mxu0 0
        %628 = vmatprep.subr.bf16.mxu0 0
        %629 = vmatpush1.bf16.msra.mxu0 0
        %630 = vmatprep.subr.bf16.mxu0 0
        %631 = vmatpush1.bf16.msra.mxu0 0
        %632 = vmatprep.subr.bf16.mxu0 0
        %633 = vmatpush1.bf16.msra.mxu0 0
        %634 = vmatprep.subr.bf16.mxu0 0
        %635 = vmatpush1.bf16.msra.mxu0 %v618
        %636 = vmatprep.subr.bf16.mxu0 0
        %637 = vmatpush2.bf16.msra.mxu0 0
        %638 = vmatprep.subr.bf16.mxu0 0
        %639 = vmatpush2.bf16.msra.mxu0 0
        %640 = vmatprep.subr.bf16.mxu0 0
        %641 = vmatpush2.bf16.msra.mxu0 0
        %642 = vmatprep.subr.bf16.mxu0 0
        %643 = vmatpush2.bf16.msra.mxu0 0
        %644 = vmatprep.subr.bf16.mxu0 0
        %645 = vmatpush2.bf16.msra.mxu0 0
        %646 = vmatprep.subr.bf16.mxu0 0
        %647 = vmatpush2.bf16.msra.mxu0 0
        %648 = vmatprep.subr.bf16.mxu0 0
        %649 = vmatpush2.bf16.msra.mxu0 0
        %650 = vmatprep.subr.bf16.mxu0 0
        %651 = vmatpush2.bf16.msra.mxu0 0
        %652 = vmatprep.mubr.bf16.mxu0 0
        %653 = vmatmul.mubr.bf16.gmra.mxu0 %v615
        %v654 = vpop.f32.mrf.mxu0
        %v655 = vadd.f32 0.0, %v654
        %v656 = vpop.f32.mrf.mxu0
        %v657 = vpop.f32.mrf.mxu0
        %v658 = vpop.f32.mrf.mxu0
        %659 = vdwg.mxu0
        %661 = vrot.lane.b32.xlu0 %v655, 8
        %v662 = vpop.permute.xlu0 %661
        %vm664 = vcmask 130112
        %665 = vst.msk [vmem:[#allocation2] sm:$0xff] %vm664, %v662
        %666 = vrot.lane.b32.xlu0 %v431, 112
        %v667 = vpop.permute.xlu0 %666
        %668 = vrot.lane.b32.xlu0 %v431, 80
        %v669 = vpop.permute.xlu0 %668
        %v671 = vsel %vm435, %v667, 0
        %v674 = vsel %vm435, %v669, 0
        %676 = vmatprep.subr.bf16.mxu0 0
        %677 = vmatpush1.bf16.xpose.msra.mxu0 0
        %678 = vmatprep.subr.bf16.mxu0 0
        %679 = vmatpush1.bf16.xpose.msra.mxu0 0
        %680 = vmatprep.subr.bf16.mxu0 0
        %681 = vmatpush1.bf16.xpose.msra.mxu0 0
        %682 = vmatprep.subr.bf16.mxu0 0
        %683 = vmatpush1.bf16.xpose.msra.mxu0 0
        %684 = vmatprep.subr.bf16.mxu0 0
        %685 = vmatpush1.bf16.xpose.msra.mxu0 0
        %686 = vmatprep.subr.bf16.mxu0 0
        %687 = vmatpush1.bf16.xpose.msra.mxu0 0
        %688 = vmatprep.subr.bf16.mxu0 0
        %689 = vmatpush1.bf16.xpose.msra.mxu0 0
        %690 = vmatprep.subr.bf16.mxu0 0
        %691 = vmatpush1.bf16.xpose.msra.mxu0 %v674
        %692 = vmatprep.subr.bf16.mxu0 0
        %693 = vmatpush2.bf16.xpose.msra.mxu0 0
        %694 = vmatprep.subr.bf16.mxu0 0
        %695 = vmatpush2.bf16.xpose.msra.mxu0 0
        %696 = vmatprep.subr.bf16.mxu0 0
        %697 = vmatpush2.bf16.xpose.msra.mxu0 0
        %698 = vmatprep.subr.bf16.mxu0 0
        %699 = vmatpush2.bf16.xpose.msra.mxu0 0
        %700 = vmatprep.subr.bf16.mxu0 0
        %701 = vmatpush2.bf16.xpose.msra.mxu0 0
        %702 = vmatprep.subr.bf16.mxu0 0
        %703 = vmatpush2.bf16.xpose.msra.mxu0 0
        %704 = vmatprep.subr.bf16.mxu0 0
        %705 = vmatpush2.bf16.xpose.msra.mxu0 0
        %706 = vmatprep.subr.bf16.mxu0 0
        %707 = vmatpush2.bf16.xpose.msra.mxu0 0
        %708 = vmatprep.mubr.bf16.mxu0 0
        %709 = vmatmul.mubr.bf16.gmra.mxu0 %v671
        %v710 = vpop.f32.mrf.mxu0
        %v711 = vadd.f32 0.0, %v710
        %v712 = vpop.f32.mrf.mxu0
        %v713 = vpop.f32.mrf.mxu0
        %v714 = vpop.f32.mrf.mxu0
        %715 = vdwg.mxu0
        %v716 = vmul.f32 %v711, 0.35355338
        %v717 = vsel %vm435, %v716, -inf
        %718 = vmax.xlane.f32.xlu0 %v717
        %v719 = vpop.xlane.xlu0 %718
        %v720 = vsub.f32 %v716, %v719
        %v721 = vmul.f32 %v720, 1.442695
        %v722 = vpow.pop %v721
        %v723 = vsel %vm435, %v722, 0.0
        %724 = vadd.xlane.f32.xlu0 %v723
        %v725 = vpop.xlane.xlu0 %724
        %v726 = vrcp.pop %v725
        %v727 = vmul.f32 %v722, %v726
        %v728 = vpack.c.bf16 %v727, %v727
        %s729 = scalar_lea.vmem %s360, 8 [#allocation10]
        %730 = vst.msk [vmem:[%s729] sm:$0xf] %vm495, %v728
        %731 = vrot.lane.b32.xlu0 %v431, 48
        %v732 = vpop.permute.xlu0 %731
        %v734 = vsel %vm435, %v728, 0
        %v737 = vsel %vm502, %v732, 0
        %739 = vmatprep.subr.bf16.mxu0 0
        %740 = vmatpush1.bf16.msra.mxu0 0
        %741 = vmatprep.subr.bf16.mxu0 0
        %742 = vmatpush1.bf16.msra.mxu0 0
        %743 = vmatprep.subr.bf16.mxu0 0
        %744 = vmatpush1.bf16.msra.mxu0 0
        %745 = vmatprep.subr.bf16.mxu0 0
        %746 = vmatpush1.bf16.msra.mxu0 0
        %747 = vmatprep.subr.bf16.mxu0 0
        %748 = vmatpush1.bf16.msra.mxu0 0
        %749 = vmatprep.subr.bf16.mxu0 0
        %750 = vmatpush1.bf16.msra.mxu0 0
        %751 = vmatprep.subr.bf16.mxu0 0
        %752 = vmatpush1.bf16.msra.mxu0 0
        %753 = vmatprep.subr.bf16.mxu0 0
        %754 = vmatpush1.bf16.msra.mxu0 %v737
        %755 = vmatprep.subr.bf16.mxu0 0
        %756 = vmatpush2.bf16.msra.mxu0 0
        %757 = vmatprep.subr.bf16.mxu0 0
        %758 = vmatpush2.bf16.msra.mxu0 0
        %759 = vmatprep.subr.bf16.mxu0 0
        %760 = vmatpush2.bf16.msra.mxu0 0
        %761 = vmatprep.subr.bf16.mxu0 0
        %762 = vmatpush2.bf16.msra.mxu0 0
        %763 = vmatprep.subr.bf16.mxu0 0
        %764 = vmatpush2.bf16.msra.mxu0 0
        %765 = vmatprep.subr.bf16.mxu0 0
        %766 = vmatpush2.bf16.msra.mxu0 0
        %767 = vmatprep.subr.bf16.mxu0 0
        %768 = vmatpush2.bf16.msra.mxu0 0
        %769 = vmatprep.subr.bf16.mxu0 0
        %770 = vmatpush2.bf16.msra.mxu0 0
        %771 = vmatprep.mubr.bf16.mxu0 0
        %772 = vmatmul.mubr.bf16.gmra.mxu0 %v734
        %v773 = vpop.f32.mrf.mxu0
        %v774 = vadd.f32 0.0, %v773
        %v775 = vpop.f32.mrf.mxu0
        %v776 = vpop.f32.mrf.mxu0
        %v777 = vpop.f32.mrf.mxu0
        %778 = vdwg.mxu0
        %780 = vrot.lane.b32.xlu0 %v774, 16
        %v781 = vpop.permute.xlu0 %780
        %vm783 = vcmask 195712
        %784 = vst.msk [vmem:[#allocation2] sm:$0xff] %vm783, %v781
        %785 = vrot.lane.b32.xlu0 %v431, 104
        %v786 = vpop.permute.xlu0 %785
        %787 = vrot.lane.b32.xlu0 %v431, 72
        %v788 = vpop.permute.xlu0 %787
        %v790 = vsel %vm435, %v786, 0
        %v793 = vsel %vm435, %v788, 0
        %795 = vmatprep.subr.bf16.mxu0 0
        %796 = vmatpush1.bf16.xpose.msra.mxu0 0
        %797 = vmatprep.subr.bf16.mxu0 0
        %798 = vmatpush1.bf16.xpose.msra.mxu0 0
        %799 = vmatprep.subr.bf16.mxu0 0
        %800 = vmatpush1.bf16.xpose.msra.mxu0 0
        %801 = vmatprep.subr.bf16.mxu0 0
        %802 = vmatpush1.bf16.xpose.msra.mxu0 0
        %803 = vmatprep.subr.bf16.mxu0 0
        %804 = vmatpush1.bf16.xpose.msra.mxu0 0
        %805 = vmatprep.subr.bf16.mxu0 0
        %806 = vmatpush1.bf16.xpose.msra.mxu0 0
        %807 = vmatprep.subr.bf16.mxu0 0
        %808 = vmatpush1.bf16.xpose.msra.mxu0 0
        %809 = vmatprep.subr.bf16.mxu0 0
        %810 = vmatpush1.bf16.xpose.msra.mxu0 %v793
        %811 = vmatprep.subr.bf16.mxu0 0
        %812 = vmatpush2.bf16.xpose.msra.mxu0 0
        %813 = vmatprep.subr.bf16.mxu0 0
        %814 = vmatpush2.bf16.xpose.msra.mxu0 0
        %815 = vmatprep.subr.bf16.mxu0 0
        %816 = vmatpush2.bf16.xpose.msra.mxu0 0
        %817 = vmatprep.subr.bf16.mxu0 0
        %818 = vmatpush2.bf16.xpose.msra.mxu0 0
        %819 = vmatprep.subr.bf16.mxu0 0
        %820 = vmatpush2.bf16.xpose.msra.mxu0 0
        %821 = vmatprep.subr.bf16.mxu0 0
        %822 = vmatpush2.bf16.xpose.msra.mxu0 0
        %823 = vmatprep.subr.bf16.mxu0 0
        %824 = vmatpush2.bf16.xpose.msra.mxu0 0
        %825 = vmatprep.subr.bf16.mxu0 0
        %826 = vmatpush2.bf16.xpose.msra.mxu0 0
        %827 = vmatprep.mubr.bf16.mxu0 0
        %828 = vmatmul.mubr.bf16.gmra.mxu0 %v790
        %v829 = vpop.f32.mrf.mxu0
        %v830 = vadd.f32 0.0, %v829
        %v831 = vpop.f32.mrf.mxu0
        %v832 = vpop.f32.mrf.mxu0
        %v833 = vpop.f32.mrf.mxu0
        %834 = vdwg.mxu0
        %v835 = vmul.f32 %v830, 0.35355338
        %v836 = vsel %vm435, %v835, -inf
        %837 = vmax.xlane.f32.xlu0 %v836
        %v838 = vpop.xlane.xlu0 %837
        %v839 = vsub.f32 %v835, %v838
        %v840 = vmul.f32 %v839, 1.442695
        %v841 = vpow.pop %v840
        %v842 = vsel %vm435, %v841, 0.0
        %843 = vadd.xlane.f32.xlu0 %v842
        %v844 = vpop.xlane.xlu0 %843
        %v845 = vrcp.pop %v844
        %v846 = vmul.f32 %v841, %v845
        %v847 = vpack.c.bf16 %v846, %v846
        %s848 = scalar_lea.vmem %s360, 12 [#allocation10]
        %849 = vst.msk [vmem:[%s848] sm:$0xf] %vm495, %v847
        %850 = vrot.lane.b32.xlu0 %v431, 40
        %v851 = vpop.permute.xlu0 %850
        %v853 = vsel %vm435, %v847, 0
        %v856 = vsel %vm502, %v851, 0
        %858 = vmatprep.subr.bf16.mxu0 0
        %859 = vmatpush1.bf16.msra.mxu0 0
        %860 = vmatprep.subr.bf16.mxu0 0
        %861 = vmatpush1.bf16.msra.mxu0 0
        %862 = vmatprep.subr.bf16.mxu0 0
        %863 = vmatpush1.bf16.msra.mxu0 0
        %864 = vmatprep.subr.bf16.mxu0 0
        %865 = vmatpush1.bf16.msra.mxu0 0
        %866 = vmatprep.subr.bf16.mxu0 0
        %867 = vmatpush1.bf16.msra.mxu0 0
        %868 = vmatprep.subr.bf16.mxu0 0
        %869 = vmatpush1.bf16.msra.mxu0 0
        %870 = vmatprep.subr.bf16.mxu0 0
        %871 = vmatpush1.bf16.msra.mxu0 0
        %872 = vmatprep.subr.bf16.mxu0 0
        %873 = vmatpush1.bf16.msra.mxu0 %v856
        %874 = vmatprep.subr.bf16.mxu0 0
        %875 = vmatpush2.bf16.msra.mxu0 0
        %876 = vmatprep.subr.bf16.mxu0 0
        %877 = vmatpush2.bf16.msra.mxu0 0
        %878 = vmatprep.subr.bf16.mxu0 0
        %879 = vmatpush2.bf16.msra.mxu0 0
        %880 = vmatprep.subr.bf16.mxu0 0
        %881 = vmatpush2.bf16.msra.mxu0 0
        %882 = vmatprep.subr.bf16.mxu0 0
        %883 = vmatpush2.bf16.msra.mxu0 0
        %884 = vmatprep.subr.bf16.mxu0 0
        %885 = vmatpush2.bf16.msra.mxu0 0
        %886 = vmatprep.subr.bf16.mxu0 0
        %887 = vmatpush2.bf16.msra.mxu0 0
        %888 = vmatprep.subr.bf16.mxu0 0
        %889 = vmatpush2.bf16.msra.mxu0 0
        %890 = vmatprep.mubr.bf16.mxu0 0
        %891 = vmatmul.mubr.bf16.gmra.mxu0 %v853
        %v892 = vpop.f32.mrf.mxu0
        %v893 = vadd.f32 0.0, %v892
        %v894 = vpop.f32.mrf.mxu0
        %v895 = vpop.f32.mrf.mxu0
        %v896 = vpop.f32.mrf.mxu0
        %897 = vdwg.mxu0
        %899 = vrot.lane.b32.xlu0 %v893, 24
        %v900 = vpop.permute.xlu0 %899
        %vm902 = vcmask 261312
        %903 = vst.msk [vmem:[#allocation2] sm:$0xff] %vm902, %v900
        %v904 = vld [vmem:[#allocation2] sm:$0xff]
        %v905 = vpack.c.bf16 %v904, %v904
        %v906 = vld [vmem:[#allocation8] sm:$0xf]
        %v907 = vld [vmem:[#allocation8 + $0x4] sm:$0xf]
        %v908 = vld [vmem:[#allocation8 + $0x8] sm:$0xf]
        %v909 = vld [vmem:[#allocation8 + $0xc] sm:$0xf]
        %v910 = vld [vmem:[%s4] sm:$0x1]
        %v912 = vlaneseq
        %v913 = vshrl.u32 %v912, 7
        %v914 = vsub.s32 0, %v913
        %v915 = vrot.slane %v910, %v914
        %v921 = vunpack.c.l.b16 %v906
        %v922 = vunpack.c.l.b16 %v907
        %v923 = vunpack.c.l.b16 %v908
        %v924 = vunpack.c.l.b16 %v909
        %v925 = vpack.c.b16 %v922, %v921
        %v926 = vpack.c.b16 %v924, %v923
        %v930 = vsel %vm387, %v905, 0
        %932 = vmatprep.subr.bf16.mxu0 0
        %933 = vmatpush1.bf16.msra.mxu0 0
        %934 = vmatprep.subr.bf16.mxu0 0
        %935 = vmatpush1.bf16.msra.mxu0 0
        %936 = vmatprep.subr.bf16.mxu0 0
        %937 = vmatpush1.bf16.msra.mxu0 0
        %938 = vmatprep.subr.bf16.mxu0 0
        %939 = vmatpush1.bf16.msra.mxu0 0
        %940 = vmatprep.subr.bf16.mxu0 0
        %941 = vmatpush1.bf16.msra.mxu0 0
        %942 = vmatprep.subr.bf16.mxu0 0
        %943 = vmatpush1.bf16.msra.mxu0 0
        %944 = vmatprep.subr.bf16.mxu0 0
        %945 = vmatpush1.bf16.msra.mxu0 %v926
        %946 = vmatprep.subr.bf16.mxu0 0
        %947 = vmatpush1.bf16.msra.mxu0 %v925
        %948 = vmatprep.subr.bf16.mxu0 0
        %949 = vmatpush2.bf16.msra.mxu0 0
        %950 = vmatprep.subr.bf16.mxu0 0
        %951 = vmatpush2.bf16.msra.mxu0 0
        %952 = vmatprep.subr.bf16.mxu0 0
        %953 = vmatpush2.bf16.msra.mxu0 0
        %954 = vmatprep.subr.bf16.mxu0 0
        %955 = vmatpush2.bf16.msra.mxu0 0
        %956 = vmatprep.subr.bf16.mxu0 0
        %957 = vmatpush2.bf16.msra.mxu0 0
        %958 = vmatprep.subr.bf16.mxu0 0
        %959 = vmatpush2.bf16.msra.mxu0 0
        %960 = vmatprep.subr.bf16.mxu0 0
        %961 = vmatpush2.bf16.msra.mxu0 0
        %962 = vmatprep.subr.bf16.mxu0 0
        %963 = vmatpush2.bf16.msra.mxu0 0
        %964 = vmatprep.mubr.bf16.mxu0 0
        %965 = vmatmul.mubr.bf16.gmra.mxu0 %v930
        %v966 = vpop.f32.mrf.mxu0
        %v967 = vadd.f32 %v915, %v966
        %v968 = vpop.f32.mrf.mxu0
        %v969 = vpop.f32.mrf.mxu0
        %v970 = vpop.f32.mrf.mxu0
        %971 = vdwg.mxu0
        %v972 = vadd.f32 %v362, %v967
        %v973 = vsel %vm387, %v972, 0.0
        %974 = vadd.xlane.f32.xlu0 %v973
        %v975 = vpop.xlane.xlu0 %974
        %v976 = vrcp.pop 32.0
        %v977 = vmul.f32 %v975, %v976
        %v978 = vsub.f32 %v972, %v977
        %v979 = vmul.f32 %v978, %v978
        %v980 = vsel %vm387, %v979, 0.0
        %981 = vadd.xlane.f32.xlu0 %v980
        %v982 = vpop.xlane.xlu0 %981
        %v983 = vmul.f32 %v982, %v976
        %v984 = vadd.f32 %v983, 1e-05
        %v985 = vrsqrt.pop %v984
        %v986 = vmul.f32 %v978, %v985
        %v987 = vld [vmem:[%s5] sm:$0x1]
        %v989 = vlaneseq
        %v990 = vshrl.u32 %v989, 7
        %v991 = vsub.s32 0, %v990
        %v992 = vrot.slane %v987, %v991
        %v994 = vmul.f32 %v986, %v992
        %v995 = vld [vmem:[%s6] sm:$0x1]
        %v997 = vlaneseq
        %v998 = vshrl.u32 %v997, 7
        %v999 = vsub.s32 0, %v998
        %v1000 = vrot.slane %v995, %v999
        %v1002 = vadd.f32 %v994, %v1000
        %1003 = vst.msk [vmem:[%s353] sm:$0xff] %vm387, %v1002
        %s1004 = sand.u32 %s190, 1
        %s1005 = scalar_lea.sflag [#allocation5], %s1004
        %s1006 = sand.u32 %s190, 1
        %s1007 = smul.addr %s1006, 8
        %s1008 = scalar_lea.vmem [#allocation9], %s1007
        %s1009 = sand.u32 %s216, 1
        %s1010 = scalar_lea.sflag [#allocation11], %s1009
        %s1011 = sand.u32 %s216, 1
        %s1012 = smul.addr %s1011, 16
        %s1013 = scalar_lea.vmem [#allocation10], %s1012
        // Predicated region
        $region61: #{tpu_custom_call.1} parent=47 // pred_check
          %p1014 = pneg %p200
        $region62: #{tpu_custom_call.1} parent=47 // pred_check_branch
          %1016 = sbr.rel (%p1014) target = $region64
        $region63: #{tpu_custom_call.1} parent=47 // pred_region
          %s1018 = ssub.s32 128, 128
          %1019 = vsyncadd %s1005, %s1018
          %s1020 = smul.addr %s30, 128
          %s1021 = scalar_lea.hbm %s7, %s1020
          %s1023 = sshll.u32 %s1008, 4
          %s1024 = int_to_ptr.vmem [resolvable:$true] %s1023
          %1026 = dma.vmem_to_hbm [thread:$0]  %s1024, 128, %s1021, %s1005
        $region64: #{tpu_custom_call.1} parent=47 // pred_fallthru
          _
        // Predicated region
        $region65: #{tpu_custom_call.1} parent=47 // pred_check
          %p1027 = pneg %p226
        $region66: #{tpu_custom_call.1} parent=47 // pred_check_branch
          %1029 = sbr.rel (%p1027) target = $region68
        $region67: #{tpu_custom_call.1} parent=47 // pred_region
          %s1031 = ssub.s32 256, 256
          %1032 = vsyncadd %s1010, %s1031
          %s1033 = smul.addr %s30, 4
          %s1034 = smul.addr %s1033, 64
          %s1035 = scalar_lea.hbm %s8, %s1034
          %s1036 = sshll.u32 %s1013, 4
          %s1037 = int_to_ptr.vmem [resolvable:$true] %s1036
          %1042 = dma.vmem_to_hbm [thread:$0]  %s1037, 256, %s1035, %s1010, 64, 64, 4
        $region68: #{tpu_custom_call.1} parent=47 // pred_fallthru
          _
      $region48: #{tpu_custom_call.1} parent=5 // pred_fallthru
        _
      %p1043 = scmp.le.s32.totalorder 2, %s25
      // Predicated region
      $region69: #{tpu_custom_call.1} parent=5 // pred_check
        %p1044 = pneg %p1043
      $region70: #{tpu_custom_call.1} parent=5 // pred_check_branch
        %1046 = sbr.rel (%p1044) target = $region72
      $region71: #{tpu_custom_call.1} parent=5 // pred_region
        %s1047 = ssub.s32 %s25, 2
        // Predicated region
        $region73: #{tpu_custom_call.1} parent=71 // pred_check
          %p1048 = pneg %p206
        $region74: #{tpu_custom_call.1} parent=71 // pred_check_branch
          %1050 = sbr.rel (%p1048) target = $region76
        $region75: #{tpu_custom_call.1} parent=71 // pred_region
          %s1051 = sand.u32 %s191, 1
          %s1052 = scalar_lea.sflag [#allocation5], %s1051
          %s1053 = sand.u32 %s191, 1
          %s1054 = smul.addr %s1053, 8
          %s1055 = scalar_lea.vmem [#allocation9], %s1054
          %1056 = dma.done %s1052, 128
        $region76: #{tpu_custom_call.1} parent=71 // pred_fallthru
          _
        // Predicated region
        $region77: #{tpu_custom_call.1} parent=71 // pred_check
          %p1057 = pneg %p232
        $region78: #{tpu_custom_call.1} parent=71 // pred_check_branch
          %1059 = sbr.rel (%p1057) target = $region80
        $region79: #{tpu_custom_call.1} parent=71 // pred_region
          %s1060 = sand.u32 %s217, 1
          %s1061 = scalar_lea.sflag [#allocation11], %s1060
          %s1062 = sand.u32 %s217, 1
          %s1063 = smul.addr %s1062, 16
          %s1064 = scalar_lea.vmem [#allocation10], %s1063
          %1065 = dma.done %s1061, 256
        $region80: #{tpu_custom_call.1} parent=71 // pred_fallthru
          _
      $region72: #{tpu_custom_call.1} parent=5 // pred_fallthru
        _
    $region6: #{tpu_custom_call.1} parent=1 // loop_footer
      %s29 = sadd.s32 1, %s25
    $region7: #{tpu_custom_call.1} parent=1 // loop_footer_branch
      %24 = sbr.rel target = $region3
    $region8: #{tpu_custom_call.1} parent=1 // loop_exit
      _
    %1066 = vsyncpa [#allocation4], 1
    %s1067 = scalar_lea.sflag [#allocation4], 1
    %1068 = vsyncpa %s1067, 1
    %1069 = vsyncpa [#allocation7], 1
    %1070 = vsyncpa [#allocation5], 1
    %s1071 = scalar_lea.sflag [#allocation5], 1
    %1072 = vsyncpa %s1071, 1
    %1073 = vsyncpa [#allocation11], 1
    %s1074 = scalar_lea.sflag [#allocation11], 1
    %1075 = vsyncpa %s1074, 1

// kernel: tpu_custom_call.1
$region0: #{tpu_custom_call.1}
  #allocation0 [shape = 'u32[]', space=smem, size = 0x4, offset = 0x4, fixed_abs, tag = 'smem constant byte address 0x4 - core index']
  #allocation1 [shape = 'u32[144,128]{1,0:T(1,128)}', space=vmem, size = 0x12000, scoped, tag = 'internal scratch']
  #allocation2 [shape = 'f32[8,32]{1,0:T(8,128)}', space=vmem, size = 0x1000, scoped, tag = 'scratch operand']
  %s0 = inlined_call_operand.hbm [shape: f32[2,8,32], index: 0, kind: input, shape index: {}]
  %s1 = inlined_call_operand.hbm [shape: bf16[32,96], index: 1, kind: input, shape index: {}]
  %s2 = inlined_call_operand.vmem [shape: f32[1,96], index: 2, kind: input, shape index: {}]
  %s3 = inlined_call_operand.hbm [shape: bf16[32,32], index: 3, kind: input, shape index: {}]
  %s4 = inlined_call_operand.vmem [shape: f32[1,32], index: 4, kind: input, shape index: {}]
  %s5 = inlined_call_operand.vmem [shape: f32[1,32], index: 5, kind: input, shape index: {}]
  %s6 = inlined_call_operand.vmem [shape: f32[1,32], index: 6, kind: input, shape index: {}]
  %s7 = inlined_call_operand.hbm [shape: f32[2,8,32], index: 7, kind: output, shape index: {0}]
  %s8 = inlined_call_operand.hbm [shape: bf16[2,4,8,8], index: 8, kind: output, shape index: {1}]
  %9 = xla_tuple %s7, %s8
  %s10 = sld [smem:[#allocation0]]
  $region81: #{tpu_custom_call.1} parent=0
    _
  %s12 = ssub.s32 1, %s10
  %s13 = scalar_select 0, %s12, %s10
  $region1: #{tpu_custom_call.1} parent=0
    #allocation3 [shape = 'u8[8192]{0}', space=vmem, size = 0x2000, scoped, tag = 'input window, operand 0']
    #allocation4 [shape = 's32[2]{0}', space=sflag, size = 0x8, scoped, tag = 'scoped memory for tpu_custom_call.1']
    #allocation5 [shape = 's32[2]{0}', space=sflag, size = 0x8, scoped, tag = 'scoped memory for tpu_custom_call.1']
    #allocation6 [shape = 'u8[8192]{0}', space=vmem, size = 0x2000, scoped, tag = 'input window, operand 1, single buffered']
    #allocation7 [shape = 's32[1]{0}', space=sflag, size = 0x4, scoped, tag = 'scoped memory for tpu_custom_call.1']
    #allocation8 [shape = 'u8[8192]{0}', space=vmem, size = 0x2000, scoped, tag = 'input window, operand 3, single buffered']
    #allocation9 [shape = 'u8[8192]{0}', space=vmem, size = 0x2000, scoped, tag = 'output window, operand 0']
    #allocation10 [shape = 'u8[16384]{0}', space=vmem, size = 0x4000, scoped, tag = 'output window, operand 1']
    #allocation11 [shape = 's32[2]{0}', space=sflag, size = 0x8, scoped, tag = 'scoped memory for tpu_custom_call.1']
    %14 = vsyncpa [#allocation4], 0
    %s15 = scalar_lea.sflag [#allocation4], 1
    %16 = vsyncpa %s15, 0
    %17 = vsyncpa [#allocation7], 0
    %18 = vsyncpa [#allocation5], 0
    %s19 = scalar_lea.sflag [#allocation5], 1
    %20 = vsyncpa %s19, 0
    %21 = vsyncpa [#allocation11], 0
    %s22 = scalar_lea.sflag [#allocation11], 1
    %23 = vsyncpa %s22, 0
    loop: start=0, step=1, limit=4
    $region2: #{tpu_custom_call.1} parent=1 // loop_pre_header
      _
    $region3: #{tpu_custom_call.1} parent=1 // loop_header
      %s25 = sphi 0, %s29
      %p26 = scmp.ge.s32.totalorder %s25, 4
      %s35 = sphi 0, %s37
      %s38 = sphi 0, %s35
      %s39 = sphi 0, %s38
      %s55 = sphi 0, %s39
      %s59 = sphi 0, %s59
      %s61 = sphi 0, %s59
      %s62 = sphi 0, %s61
      %s76 = sphi 0, %s62
      %s80 = sphi 0, %s80
      %s82 = sphi 0, %s80
      %s83 = sphi 0, %s82
      %s97 = sphi 0, %s83
      %s101 = sphi 0, %s101
      %s103 = sphi 0, %s101
      %s104 = sphi 0, %s103
      %s118 = sphi 0, %s104
      %s122 = sphi 0, %s122
      %s124 = sphi 0, %s122
      %s125 = sphi 0, %s124
      %s139 = sphi 0, %s125
      %s143 = sphi 0, %s143
      %s145 = sphi 0, %s143
      %s146 = sphi 0, %s145
      %s160 = sphi 0, %s146
      %s164 = sphi 0, %s164
      %s166 = sphi 0, %s164
      %s167 = sphi 0, %s166
      %s181 = sphi 0, %s167
      %s187 = sphi 0, %s189
      %s190 = sphi 0, %s187
      %s191 = sphi 0, %s190
      %s207 = sphi 0, %s191
      %s213 = sphi 0, %s215
      %s216 = sphi 0, %s213
      %s217 = sphi 0, %s216
      %s233 = sphi 0, %s217
    $region4: #{tpu_custom_call.1} parent=1 // loop_header_branch
      %28 = sbr.rel (%p26) target = $region8
    $region5: #{tpu_custom_call.1} parent=1 // loop_body
      %s30 = ssub.s32 %s25, 1
      %s31 = ssub.s32 %s25, 2
      %s32 = sadd.s32 %s25, 1
      %s33 = ssub.s32 %s25, %s32
      %p34 = scmp.eq.s32.totalorder %s33, 0
      %s36 = sadd.s32 %s35, 1
      %s37 = scalar_select %p34, %s35, %s36
      %p40 = pneg %p34
      %p41 = scmp.eq.s32.totalorder %s25, 1
      %p42 = por %p40, %p41
      %p43 = scmp.ne.s32.totalorder %s35, %s38
      %p44 = scmp.eq.s32.totalorder %s25, 0
      %p45 = por %p43, %p44
      %p46 = scmp.ne.s32.totalorder %s35, %s38
      %p47 = scmp.eq.s32.totalorder %s30, 1
      %p48 = por %p46, %p47
      %p49 = scmp.ne.s32.totalorder %s38, %s39
      %p50 = scmp.eq.s32.totalorder %s30, 0
      %p51 = por %p49, %p50
      %p52 = scmp.ne.s32.totalorder %s38, %s39
      %p53 = scmp.eq.s32.totalorder %s31, 1
      %p54 = por %p52, %p53
      %p56 = scmp.ne.s32.totalorder %s39, %s55
      %p57 = scmp.eq.s32.totalorder %s31, 0
      %p58 = por %p56, %p57
      %s60 = sadd.s32 %s59, 1
      %p63 = scmp.eq.s32.totalorder %s25, 1
      %p64 = scmp.ne.s32.totalorder %s59, %s61
      %p65 = scmp.eq.s32.totalorder %s25, 0
      %p66 = por %p64, %p65
      %p67 = scmp.ne.s32.totalorder %s59, %s61
      %p68 = scmp.eq.s32.totalorder %s30, 1
      %p69 = por %p67, %p68
      %p70 = scmp.ne.s32.totalorder %s61, %s62
      %p71 = scmp.eq.s32.totalorder %s30, 0
      %p72 = por %p70, %p71
      %p73 = scmp.ne.s32.totalorder %s61, %s62
      %p74 = scmp.eq.s32.totalorder %s31, 1
      %p75 = por %p73, %p74
      %p77 = scmp.ne.s32.totalorder %s62, %s76
      %p78 = scmp.eq.s32.totalorder %s31, 0
      %p79 = por %p77, %p78
      %s81 = sadd.s32 %s80, 1
      %p84 = scmp.eq.s32.totalorder %s25, 1
      %p85 = scmp.ne.s32.totalorder %s80, %s82
      %p86 = scmp.eq.s32.totalorder %s25, 0
      %p87 = por %p85, %p86
      %p88 = scmp.ne.s32.totalorder %s80, %s82
      %p89 = scmp.eq.s32.totalorder %s30, 1
      %p90 = por %p88, %p89
      %p91 = scmp.ne.s32.totalorder %s82, %s83
      %p92 = scmp.eq.s32.totalorder %s30, 0
      %p93 = por %p91, %p92
      %p94 = scmp.ne.s32.totalorder %s82, %s83
      %p95 = scmp.eq.s32.totalorder %s31, 1
      %p96 = por %p94, %p95
      %p98 = scmp.ne.s32.totalorder %s83, %s97
      %p99 = scmp.eq.s32.totalorder %s31, 0
      %p100 = por %p98, %p99
      %s102 = sadd.s32 %s101, 1
      %p105 = scmp.eq.s32.totalorder %s25, 1
      %p106 = scmp.ne.s32.totalorder %s101, %s103
      %p107 = scmp.eq.s32.totalorder %s25, 0
      %p108 = por %p106, %p107
      %p109 = scmp.ne.s32.totalorder %s101, %s103
      %p110 = scmp.eq.s32.totalorder %s30, 1
      %p111 = por %p109, %p110
      %p112 = scmp.ne.s32.totalorder %s103, %s104
      %p113 = scmp.eq.s32.totalorder %s30, 0
      %p114 = por %p112, %p113
      %p115 = scmp.ne.s32.totalorder %s103, %s104
      %p116 = scmp.eq.s32.totalorder %s31, 1
      %p117 = por %p115, %p116
      %p119 = scmp.ne.s32.totalorder %s104, %s118
      %p120 = scmp.eq.s32.totalorder %s31, 0
      %p121 = por %p119, %p120
      %s123 = sadd.s32 %s122, 1
      %p126 = scmp.eq.s32.totalorder %s25, 1
      %p127 = scmp.ne.s32.totalorder %s122, %s124
      %p128 = scmp.eq.s32.totalorder %s25, 0
      %p129 = por %p127, %p128
      %p130 = scmp.ne.s32.totalorder %s122, %s124
      %p131 = scmp.eq.s32.totalorder %s30, 1
      %p132 = por %p130, %p131
      %p133 = scmp.ne.s32.totalorder %s124, %s125
      %p134 = scmp.eq.s32.totalorder %s30, 0
      %p135 = por %p133, %p134
      %p136 = scmp.ne.s32.totalorder %s124, %s125
      %p137 = scmp.eq.s32.totalorder %s31, 1
      %p138 = por %p136, %p137
      %p140 = scmp.ne.s32.totalorder %s125, %s139
      %p141 = scmp.eq.s32.totalorder %s31, 0
      %p142 = por %p140, %p141
      %s144 = sadd.s32 %s143, 1
      %p147 = scmp.eq.s32.totalorder %s25, 1
      %p148 = scmp.ne.s32.totalorder %s143, %s145
      %p149 = scmp.eq.s32.totalorder %s25, 0
      %p150 = por %p148, %p149
      %p151 = scmp.ne.s32.totalorder %s143, %s145
      %p152 = scmp.eq.s32.totalorder %s30, 1
      %p153 = por %p151, %p152
      %p154 = scmp.ne.s32.totalorder %s145, %s146
      %p155 = scmp.eq.s32.totalorder %s30, 0
      %p156 = por %p154, %p155
      %p157 = scmp.ne.s32.totalorder %s145, %s146
      %p158 = scmp.eq.s32.totalorder %s31, 1
      %p159 = por %p157, %p158
      %p161 = scmp.ne.s32.totalorder %s146, %s160
      %p162 = scmp.eq.s32.totalorder %s31, 0
      %p163 = por %p161, %p162
      %s165 = sadd.s32 %s164, 1
      %p168 = scmp.eq.s32.totalorder %s25, 1
      %p169 = scmp.ne.s32.totalorder %s164, %s166
      %p170 = scmp.eq.s32.totalorder %s25, 0
      %p171 = por %p169, %p170
      %p172 = scmp.ne.s32.totalorder %s164, %s166
      %p173 = scmp.eq.s32.totalorder %s30, 1
      %p174 = por %p172, %p173
      %p175 = scmp.ne.s32.totalorder %s166, %s167
      %p176 = scmp.eq.s32.totalorder %s30, 0
      %p177 = por %p175, %p176
      %p178 = scmp.ne.s32.totalorder %s166, %s167
      %p179 = scmp.eq.s32.totalorder %s31, 1
      %p180 = por %p178, %p179
      %p182 = scmp.ne.s32.totalorder %s167, %s181
      %p183 = scmp.eq.s32.totalorder %s31, 0
      %p184 = por %p182, %p183
      %s185 = ssub.s32 %s25, %s32
      %p186 = scmp.eq.s32.totalorder %s185, 0
      %s188 = sadd.s32 %s187, 1
      %s189 = scalar_select %p186, %s187, %s188
      %p192 = pneg %p186
      %p193 = scmp.eq.s32.totalorder %s25, 1
      %p194 = por %p192, %p193
      %p195 = scmp.ne.s32.totalorder %s187, %s190
      %p196 = scmp.eq.s32.totalorder %s25, 0
      %p197 = por %p195, %p196
      %p198 = scmp.ne.s32.totalorder %s187, %s190
      %p199 = scmp.eq.s32.totalorder %s30, 1
      %p200 = por %p198, %p199
      %p201 = scmp.ne.s32.totalorder %s190, %s191
      %p202 = scmp.eq.s32.totalorder %s30, 0
      %p203 = por %p201, %p202
      %p204 = scmp.ne.s32.totalorder %s190, %s191
      %p205 = scmp.eq.s32.totalorder %s31, 1
      %p206 = por %p204, %p205
      %p208 = scmp.ne.s32.totalorder %s191, %s207
      %p209 = scmp.eq.s32.totalorder %s31, 0
      %p210 = por %p208, %p209
      %s211 = ssub.s32 %s25, %s32
      %p212 = scmp.eq.s32.totalorder %s211, 0
      %s214 = sadd.s32 %s213, 1
      %s215 = scalar_select %p212, %s213, %s214
      %p218 = pneg %p212
      %p219 = scmp.eq.s32.totalorder %s25, 1
      %p220 = por %p218, %p219
      %p221 = scmp.ne.s32.totalorder %s213, %s216
      %p222 = scmp.eq.s32.totalorder %s25, 0
      %p223 = por %p221, %p222
      %p224 = scmp.ne.s32.totalorder %s213, %s216
      %p225 = scmp.eq.s32.totalorder %s30, 1
      %p226 = por %p224, %p225
      %p227 = scmp.ne.s32.totalorder %s216, %s217
      %p228 = scmp.eq.s32.totalorder %s30, 0
      %p229 = por %p227, %p228
      %p230 = scmp.ne.s32.totalorder %s216, %s217
      %p231 = scmp.eq.s32.totalorder %s31, 1
      %p232 = por %p230, %p231
      %p234 = scmp.ne.s32.totalorder %s217, %s233
      %p235 = scmp.eq.s32.totalorder %s31, 0
      %p236 = por %p234, %p235
      %p237 = scmp.le.s32.totalorder 1, %s25
      %p238 = scmp.lt.s32.totalorder %s25, 3
      %p239 = pnand %p237, %p238
      %p240 = pneg %p239
      // Predicated region
      $region9: #{tpu_custom_call.1} parent=5 // pred_check
        _
      $region10: #{tpu_custom_call.1} parent=5 // pred_check_branch
        %242 = sbr.rel (%p239) target = $region12
      $region11: #{tpu_custom_call.1} parent=5 // pred_region
        %s243 = ssub.s32 %s25, 1
        // Predicated region
        $region13: #{tpu_custom_call.1} parent=11 // pred_check
          %p244 = pneg %p72
        $region14: #{tpu_custom_call.1} parent=11 // pred_check_branch
          %246 = sbr.rel (%p244) target = $region16
        $region15: #{tpu_custom_call.1} parent=11 // pred_region
          %s248 = ssub.s32 256, 256
          %249 = vsyncadd [#allocation7], %s248
          %s250 = sshll.u32 [#allocation6], 4
          %s251 = int_to_ptr.vmem [resolvable:$true] %s250
          %256 = dma.hbm_to_vmem [thread:$0]  %s1, 256, %s251, [#allocation7], 64, 64, 4
        $region16: #{tpu_custom_call.1} parent=11 // pred_fallthru
          _
        // Predicated region
        $region17: #{tpu_custom_call.1} parent=11 // pred_check
          %p257 = pneg %p93
        $region18: #{tpu_custom_call.1} parent=11 // pred_check_branch
          %259 = sbr.rel (%p257) target = $region20
        $region19: #{tpu_custom_call.1} parent=11 // pred_region
          _
        $region20: #{tpu_custom_call.1} parent=11 // pred_fallthru
          _
        // Predicated region
        $region21: #{tpu_custom_call.1} parent=11 // pred_check
          %p260 = pneg %p114
        $region22: #{tpu_custom_call.1} parent=11 // pred_check_branch
          %262 = sbr.rel (%p260) target = $region24
        $region23: #{tpu_custom_call.1} parent=11 // pred_region
          %s264 = ssub.s32 256, 256
          %265 = vsyncadd [#allocation7], %s264
          %s266 = sshll.u32 [#allocation8], 4
          %s267 = int_to_ptr.vmem [resolvable:$true] %s266
          %272 = dma.hbm_to_vmem [thread:$0]  %s3, 256, %s267, [#allocation7], 64, 64, 4
        $region24: #{tpu_custom_call.1} parent=11 // pred_fallthru
          _
        // Predicated region
        $region25: #{tpu_custom_call.1} parent=11 // pred_check
          %p273 = pneg %p135
        $region26: #{tpu_custom_call.1} parent=11 // pred_check_branch
          %275 = sbr.rel (%p273) target = $region28
        $region27: #{tpu_custom_call.1} parent=11 // pred_region
          _
        $region28: #{tpu_custom_call.1} parent=11 // pred_fallthru
          _
        // Predicated region
        $region29: #{tpu_custom_call.1} parent=11 // pred_check
          %p276 = pneg %p156
        $region30: #{tpu_custom_call.1} parent=11 // pred_check_branch
          %278 = sbr.rel (%p276) target = $region32
        $region31: #{tpu_custom_call.1} parent=11 // pred_region
          _
        $region32: #{tpu_custom_call.1} parent=11 // pred_fallthru
          _
        // Predicated region
        $region33: #{tpu_custom_call.1} parent=11 // pred_check
          %p279 = pneg %p177
        $region34: #{tpu_custom_call.1} parent=11 // pred_check_branch
          %281 = sbr.rel (%p279) target = $region36
        $region35: #{tpu_custom_call.1} parent=11 // pred_region
          _
        $region36: #{tpu_custom_call.1} parent=11 // pred_fallthru
          _
      $region12: #{tpu_custom_call.1} parent=5 // pred_fallthru
        _
      %p282 = scmp.lt.s32.totalorder %s25, 2
      // Predicated region
      $region37: #{tpu_custom_call.1} parent=5 // pred_check
        %p283 = pneg %p282
      $region38: #{tpu_custom_call.1} parent=5 // pred_check_branch
        %285 = sbr.rel (%p283) target = $region40
      $region39: #{tpu_custom_call.1} parent=5 // pred_region
        // Predicated region
        $region41: #{tpu_custom_call.1} parent=39 // pred_check
          %p286 = pneg %p45
        $region42: #{tpu_custom_call.1} parent=39 // pred_check_branch
          %288 = sbr.rel (%p286) target = $region44
        $region43: #{tpu_custom_call.1} parent=39 // pred_region
          %s289 = sand.u32 %s35, 1
          %s290 = scalar_lea.sflag [#allocation4], %s289
          %s291 = sand.u32 %s35, 1
          %s292 = smul.addr %s291, 8
          %s293 = scalar_lea.vmem [#allocation3], %s292
          %s295 = ssub.s32 128, 128
          %296 = vsyncadd %s290, %s295
          %s297 = smul.addr %s25, 128
          %s298 = scalar_lea.hbm %s0, %s297
          %s300 = sshll.u32 %s293, 4
          %s301 = int_to_ptr.vmem [resolvable:$true] %s300
          %303 = dma.hbm_to_vmem [thread:$0]  %s298, 128, %s301, %s290
        $region44: #{tpu_custom_call.1} parent=39 // pred_fallthru
          _
      $region40: #{tpu_custom_call.1} parent=5 // pred_fallthru
        _
      %p304 = scmp.le.s32.totalorder 1, %s25
      %p305 = scmp.lt.s32.totalorder %s25, 3
      %p306 = pnand %p304, %p305
      %p307 = pneg %p306
      // Predicated region
      $region45: #{tpu_custom_call.1} parent=5 // pred_check
        _
      $region46: #{tpu_custom_call.1} parent=5 // pred_check_branch
        %309 = sbr.rel (%p306) target = $region48
      $region47: #{tpu_custom_call.1} parent=5 // pred_region
        %s310 = ssub.s32 %s25, 1
        %s311 = sand.u32 %s38, 1
        %s312 = scalar_lea.sflag [#allocation4], %s311
        %s313 = sand.u32 %s38, 1
        %s314 = smul.addr %s313, 8
        %s315 = scalar_lea.vmem [#allocation3], %s314
        // Predicated region
        $region49: #{tpu_custom_call.1} parent=47 // pred_check
          %p316 = pneg %p51
        $region50: #{tpu_custom_call.1} parent=47 // pred_check_branch
          %318 = sbr.rel (%p316) target = $region52
        $region51: #{tpu_custom_call.1} parent=47 // pred_region
          %319 = dma.done %s312, 128
        $region52: #{tpu_custom_call.1} parent=47 // pred_fallthru
          _
        // Predicated region
        $region53: #{tpu_custom_call.1} parent=47 // pred_check
          %p320 = pneg %p72
        $region54: #{tpu_custom_call.1} parent=47 // pred_check_branch
          %322 = sbr.rel (%p320) target = $region56
        $region55: #{tpu_custom_call.1} parent=47 // pred_region
          %323 = dma.done [#allocation7], 256
        $region56: #{tpu_custom_call.1} parent=47 // pred_fallthru
          _
        // Predicated region
        $region57: #{tpu_custom_call.1} parent=47 // pred_check
          %p324 = pneg %p114
        $region58: #{tpu_custom_call.1} parent=47 // pred_check_branch
          %326 = sbr.rel (%p324) target = $region60
        $region59: #{tpu_custom_call.1} parent=47 // pred_region
          %327 = dma.done [#allocation7], 256
        $region60: #{tpu_custom_call.1} parent=47 // pred_fallthru
          _
        %s328 = sand.u32 %s38, 1
        %s329 = scalar_lea.sflag [#allocation4], %s328
        %s330 = sand.u32 %s38, 1
        %s331 = smul.addr %s330, 8
        %s332 = scalar_lea.vmem [#allocation3], %s331
        %p333 = pneg %p51
        %p334 = pneg %p48
        %p335 = pneg %p72
        %p336 = pneg %p69
        %p337 = pneg %p93
        %p338 = pneg %p90
        %p339 = pneg %p114
        %p340 = pneg %p111
        %p341 = pneg %p135
        %p342 = pneg %p132
        %p343 = pneg %p156
        %p344 = pneg %p153
        %p345 = pneg %p177
        %p346 = pneg %p174
        %p347 = pneg %p203
        %p348 = pneg %p200
        %s349 = sand.u32 %s190, 1
        %s350 = scalar_lea.sflag [#allocation5], %s349
        %s351 = sand.u32 %s190, 1
        %s352 = smul.addr %s351, 8
        %s353 = scalar_lea.vmem [#allocation9], %s352
        %p354 = pneg %p229
        %p355 = pneg %p226
        %s356 = sand.u32 %s216, 1
        %s357 = scalar_lea.sflag [#allocation11], %s356
        %s358 = sand.u32 %s216, 1
        %s359 = smul.addr %s358, 16
        %s360 = scalar_lea.vmem [#allocation10], %s359
        %v362 = vld [vmem:[%s315] sm:$0xff]
        %v363 = vpack.c.bf16 %v362, %v362
        %v364 = vld [vmem:[#allocation6] sm:$0xf]
        %v365 = vld [vmem:[#allocation6 + $0x4] sm:$0xf]
        %v366 = vld [vmem:[#allocation6 + $0x8] sm:$0xf]
        %v367 = vld [vmem:[#allocation6 + $0xc] sm:$0xf]
        %v368 = vld [vmem:[%s2] sm:$0x1]
        %v370 = vlaneseq
        %v371 = vshrl.u32 %v370, 7
        %v372 = vsub.s32 0, %v371
        %v373 = vrot.slane %v368, %v372
        %v379 = vunpack.c.l.b16 %v364
        %v380 = vunpack.c.l.b16 %v365
        %v381 = vunpack.c.l.b16 %v366
        %v382 = vunpack.c.l.b16 %v367
        %v383 = vpack.c.b16 %v380, %v379
        %v384 = vpack.c.b16 %v382, %v381
        %vm387 = vcmask 261120
        %v389 = vsel %vm387, %v363, 0
        %391 = vmatprep.subr.bf16.mxu0 0
        %392 = vmatpush1.bf16.msra.mxu0 0
        %393 = vmatprep.subr.bf16.mxu0 0
        %394 = vmatpush1.bf16.msra.mxu0 0
        %395 = vmatprep.subr.bf16.mxu0 0
        %396 = vmatpush1.bf16.msra.mxu0 0
        %397 = vmatprep.subr.bf16.mxu0 0
        %398 = vmatpush1.bf16.msra.mxu0 0
        %399 = vmatprep.subr.bf16.mxu0 0
        %400 = vmatpush1.bf16.msra.mxu0 0
        %401 = vmatprep.subr.bf16.mxu0 0
        %402 = vmatpush1.bf16.msra.mxu0 0
        %403 = vmatprep.subr.bf16.mxu0 0
        %404 = vmatpush1.bf16.msra.mxu0 %v384
        %405 = vmatprep.subr.bf16.mxu0 0
        %406 = vmatpush1.bf16.msra.mxu0 %v383
        %407 = vmatprep.subr.bf16.mxu0 0
        %408 = vmatpush2.bf16.msra.mxu0 0
        %409 = vmatprep.subr.bf16.mxu0 0
        %410 = vmatpush2.bf16.msra.mxu0 0
        %411 = vmatprep.subr.bf16.mxu0 0
        %412 = vmatpush2.bf16.msra.mxu0 0
        %413 = vmatprep.subr.bf16.mxu0 0
        %414 = vmatpush2.bf16.msra.mxu0 0
        %415 = vmatprep.subr.bf16.mxu0 0
        %416 = vmatpush2.bf16.msra.mxu0 0
        %417 = vmatprep.subr.bf16.mxu0 0
        %418 = vmatpush2.bf16.msra.mxu0 0
        %419 = vmatprep.subr.bf16.mxu0 0
        %420 = vmatpush2.bf16.msra.mxu0 0
        %421 = vmatprep.subr.bf16.mxu0 0
        %422 = vmatpush2.bf16.msra.mxu0 0
        %423 = vmatprep.mubr.bf16.mxu0 0
        %424 = vmatmul.mubr.bf16.gmra.mxu0 %v389
        %v425 = vpop.f32.mrf.mxu0
        %v426 = vadd.f32 %v373, %v425
        %v427 = vpop.f32.mrf.mxu0
        %v428 = vpop.f32.mrf.mxu0
        %v429 = vpop.f32.mrf.mxu0
        %430 = vdwg.mxu0
        %v431 = vpack.c.bf16 %v426, %v426
        %433 = vrot.lane.b32.xlu0 %v431, 96
        %v434 = vpop.permute.xlu0 %433
        %vm435 = vcmask 64512
        %v437 = vsel %vm435, %v431, 0
        %v440 = vsel %vm435, %v434, 0
        %442 = vmatprep.subr.bf16.mxu0 0
        %443 = vmatpush1.bf16.xpose.msra.mxu0 0
        %444 = vmatprep.subr.bf16.mxu0 0
        %445 = vmatpush1.bf16.xpose.msra.mxu0 0
        %446 = vmatprep.subr.bf16.mxu0 0
        %447 = vmatpush1.bf16.xpose.msra.mxu0 0
        %448 = vmatprep.subr.bf16.mxu0 0
        %449 = vmatpush1.bf16.xpose.msra.mxu0 0
        %450 = vmatprep.subr.bf16.mxu0 0
        %451 = vmatpush1.bf16.xpose.msra.mxu0 0
        %452 = vmatprep.subr.bf16.mxu0 0
        %453 = vmatpush1.bf16.xpose.msra.mxu0 0
        %454 = vmatprep.subr.bf16.mxu0 0
        %455 = vmatpush1.bf16.xpose.msra.mxu0 0
        %456 = vmatprep.subr.bf16.mxu0 0
        %457 = vmatpush1.bf16.xpose.msra.mxu0 %v440
        %458 = vmatprep.subr.bf16.mxu0 0
        %459 = vmatpush2.bf16.xpose.msra.mxu0 0
        %460 = vmatprep.subr.bf16.mxu0 0
        %461 = vmatpush2.bf16.xpose.msra.mxu0 0
        %462 = vmatprep.subr.bf16.mxu0 0
        %463 = vmatpush2.bf16.xpose.msra.mxu0 0
        %464 = vmatprep.subr.bf16.mxu0 0
        %465 = vmatpush2.bf16.xpose.msra.mxu0 0
        %466 = vmatprep.subr.bf16.mxu0 0
        %467 = vmatpush2.bf16.xpose.msra.mxu0 0
        %468 = vmatprep.subr.bf16.mxu0 0
        %469 = vmatpush2.bf16.xpose.msra.mxu0 0
        %470 = vmatprep.subr.bf16.mxu0 0
        %471 = vmatpush2.bf16.xpose.msra.mxu0 0
        %472 = vmatprep.subr.bf16.mxu0 0
        %473 = vmatpush2.bf16.xpose.msra.mxu0 0
        %474 = vmatprep.mubr.bf16.mxu0 0
        %475 = vmatmul.mubr.bf16.gmra.mxu0 %v437
        %v476 = vpop.f32.mrf.mxu0
        %v477 = vadd.f32 0.0, %v476
        %v478 = vpop.f32.mrf.mxu0
        %v479 = vpop.f32.mrf.mxu0
        %v480 = vpop.f32.mrf.mxu0
        %481 = vdwg.mxu0
        %v482 = vmul.f32 %v477, 0.35355338
        %v483 = vsel %vm435, %v482, -inf
        %484 = vmax.xlane.f32.xlu0 %v483
        %v485 = vpop.xlane.xlu0 %484
        %v486 = vsub.f32 %v482, %v485
        %v487 = vmul.f32 %v486, 1.442695
        %v488 = vpow.pop %v487
        %v489 = vsel %vm435, %v488, 0.0
        %490 = vadd.xlane.f32.xlu0 %v489
        %v491 = vpop.xlane.xlu0 %490
        %v492 = vrcp.pop %v491
        %v493 = vmul.f32 %v488, %v492
        %v494 = vpack.c.bf16 %v493, %v493
        %vm495 = vcmask 60416
        %496 = vst.msk [vmem:[%s360] sm:$0xf] %vm495, %v494
        %497 = vrot.lane.b32.xlu0 %v431, 64
        %v498 = vpop.permute.xlu0 %497
        %v500 = vsel %vm435, %v494, 0
        %vm502 = vcmask 1043456
        %v504 = vsel %vm502, %v498, 0
        %506 = vmatprep.subr.bf16.mxu0 0
        %507 = vmatpush1.bf16.msra.mxu0 0
        %508 = vmatprep.subr.bf16.mxu0 0
        %509 = vmatpush1.bf16.msra.mxu0 0
        %510 = vmatprep.subr.bf16.mxu0 0
        %511 = vmatpush1.bf16.msra.mxu0 0
        %512 = vmatprep.subr.bf16.mxu0 0
        %513 = vmatpush1.bf16.msra.mxu0 0
        %514 = vmatprep.subr.bf16.mxu0 0
        %515 = vmatpush1.bf16.msra.mxu0 0
        %516 = vmatprep.subr.bf16.mxu0 0
        %517 = vmatpush1.bf16.msra.mxu0 0
        %518 = vmatprep.subr.bf16.mxu0 0
        %519 = vmatpush1.bf16.msra.mxu0 0
        %520 = vmatprep.subr.bf16.mxu0 0
        %521 = vmatpush1.bf16.msra.mxu0 %v504
        %522 = vmatprep.subr.bf16.mxu0 0
        %523 = vmatpush2.bf16.msra.mxu0 0
        %524 = vmatprep.subr.bf16.mxu0 0
        %525 = vmatpush2.bf16.msra.mxu0 0
        %526 = vmatprep.subr.bf16.mxu0 0
        %527 = vmatpush2.bf16.msra.mxu0 0
        %528 = vmatprep.subr.bf16.mxu0 0
        %529 = vmatpush2.bf16.msra.mxu0 0
        %530 = vmatprep.subr.bf16.mxu0 0
        %531 = vmatpush2.bf16.msra.mxu0 0
        %532 = vmatprep.subr.bf16.mxu0 0
        %533 = vmatpush2.bf16.msra.mxu0 0
        %534 = vmatprep.subr.bf16.mxu0 0
        %535 = vmatpush2.bf16.msra.mxu0 0
        %536 = vmatprep.subr.bf16.mxu0 0
        %537 = vmatpush2.bf16.msra.mxu0 0
        %538 = vmatprep.mubr.bf16.mxu0 0
        %539 = vmatmul.mubr.bf16.gmra.mxu0 %v500
        %v540 = vpop.f32.mrf.mxu0
        %v541 = vadd.f32 0.0, %v540
        %v542 = vpop.f32.mrf.mxu0
        %v543 = vpop.f32.mrf.mxu0
        %v544 = vpop.f32.mrf.mxu0
        %545 = vdwg.mxu0
        %546 = vst.msk [vmem:[#allocation2] sm:$0xff] %vm435, %v541
        %547 = vrot.lane.b32.xlu0 %v431, 120
        %v548 = vpop.permute.xlu0 %547
        %549 = vrot.lane.b32.xlu0 %v431, 88
        %v550 = vpop.permute.xlu0 %549
        %v552 = vsel %vm435, %v548, 0
        %v555 = vsel %vm435, %v550, 0
        %557 = vmatprep.subr.bf16.mxu0 0
        %558 = vmatpush1.bf16.xpose.msra.mxu0 0
        %559 = vmatprep.subr.bf16.mxu0 0
        %560 = vmatpush1.bf16.xpose.msra.mxu0 0
        %561 = vmatprep.subr.bf16.mxu0 0
        %562 = vmatpush1.bf16.xpose.msra.mxu0 0
        %563 = vmatprep.subr.bf16.mxu0 0
        %564 = vmatpush1.bf16.xpose.msra.mxu0 0
        %565 = vmatprep.subr.bf16.mxu0 0
        %566 = vmatpush1.bf16.xpose.msra.mxu0 0
        %567 = vmatprep.subr.bf16.mxu0 0
        %568 = vmatpush1.bf16.xpose.msra.mxu0 0
        %569 = vmatprep.subr.bf16.mxu0 0
        %570 = vmatpush1.bf16.xpose.msra.mxu0 0
        %571 = vmatprep.subr.bf16.mxu0 0
        %572 = vmatpush1.bf16.xpose.msra.mxu0 %v555
        %573 = vmatprep.subr.bf16.mxu0 0
        %574 = vmatpush2.bf16.xpose.msra.mxu0 0
        %575 = vmatprep.subr.bf16.mxu0 0
        %576 = vmatpush2.bf16.xpose.msra.mxu0 0
        %577 = vmatprep.subr.bf16.mxu0 0
        %578 = vmatpush2.bf16.xpose.msra.mxu0 0
        %579 = vmatprep.subr.bf16.mxu0 0
        %580 = vmatpush2.bf16.xpose.msra.mxu0 0
        %581 = vmatprep.subr.bf16.mxu0 0
        %582 = vmatpush2.bf16.xpose.msra.mxu0 0
        %583 = vmatprep.subr.bf16.mxu0 0
        %584 = vmatpush2.bf16.xpose.msra.mxu0 0
        %585 = vmatprep.subr.bf16.mxu0 0
        %586 = vmatpush2.bf16.xpose.msra.mxu0 0
        %587 = vmatprep.subr.bf16.mxu0 0
        %588 = vmatpush2.bf16.xpose.msra.mxu0 0
        %589 = vmatprep.mubr.bf16.mxu0 0
        %590 = vmatmul.mubr.bf16.gmra.mxu0 %v552
        %v591 = vpop.f32.mrf.mxu0
        %v592 = vadd.f32 0.0, %v591
        %v593 = vpop.f32.mrf.mxu0
        %v594 = vpop.f32.mrf.mxu0
        %v595 = vpop.f32.mrf.mxu0
        %596 = vdwg.mxu0
        %v597 = vmul.f32 %v592, 0.35355338
        %v598 = vsel %vm435, %v597, -inf
        %599 = vmax.xlane.f32.xlu0 %v598
        %v600 = vpop.xlane.xlu0 %599
        %v601 = vsub.f32 %v597, %v600
        %v602 = vmul.f32 %v601, 1.442695
        %v603 = vpow.pop %v602
        %v604 = vsel %vm435, %v603, 0.0
        %605 = vadd.xlane.f32.xlu0 %v604
        %v606 = vpop.xlane.xlu0 %605
        %v607 = vrcp.pop %v606
        %v608 = vmul.f32 %v603, %v607
        %v609 = vpack.c.bf16 %v608, %v608
        %s610 = scalar_lea.vmem %s360, 4 [#allocation10]
        %611 = vst.msk [vmem:[%s610] sm:$0xf] %vm495, %v609
        %612 = vrot.lane.b32.xlu0 %v431, 56
        %v613 = vpop.permute.xlu0 %612
        %v615 = vsel %vm435, %v609, 0
        %v618 = vsel %vm502, %v613, 0
        %620 = vmatprep.subr.bf16.mxu0 0
        %621 = vmatpush1.bf16.msra.mxu0 0
        %622 = vmatprep.subr.bf16.mxu0 0
        %623 = vmatpush1.bf16.msra.mxu0 0
        %624 = vmatprep.subr.bf16.mxu0 0
        %625 = vmatpush1.bf16.msra.mxu0 0
        %626 = vmatprep.subr.bf16.mxu0 0
        %627 = vmatpush1.bf16.msra.mxu0 0
        %628 = vmatprep.subr.bf16.mxu0 0
        %629 = vmatpush1.bf16.msra.mxu0 0
        %630 = vmatprep.subr.bf16.mxu0 0
        %631 = vmatpush1.bf16.msra.mxu0 0
        %632 = vmatprep.subr.bf16.mxu0 0
        %633 = vmatpush1.bf16.msra.mxu0 0
        %634 = vmatprep.subr.bf16.mxu0 0
        %635 = vmatpush1.bf16.msra.mxu0 %v618
        %636 = vmatprep.subr.bf16.mxu0 0
        %637 = vmatpush2.bf16.msra.mxu0 0
        %638 = vmatprep.subr.bf16.mxu0 0
        %639 = vmatpush2.bf16.msra.mxu0 0
        %640 = vmatprep.subr.bf16.mxu0 0
        %641 = vmatpush2.bf16.msra.mxu0 0
        %642 = vmatprep.subr.bf16.mxu0 0
        %643 = vmatpush2.bf16.msra.mxu0 0
        %644 = vmatprep.subr.bf16.mxu0 0
        %645 = vmatpush2.bf16.msra.mxu0 0
        %646 = vmatprep.subr.bf16.mxu0 0
        %647 = vmatpush2.bf16.msra.mxu0 0
        %648 = vmatprep.subr.bf16.mxu0 0
        %649 = vmatpush2.bf16.msra.mxu0 0
        %650 = vmatprep.subr.bf16.mxu0 0
        %651 = vmatpush2.bf16.msra.mxu0 0
        %652 = vmatprep.mubr.bf16.mxu0 0
        %653 = vmatmul.mubr.bf16.gmra.mxu0 %v615
        %v654 = vpop.f32.mrf.mxu0
        %v655 = vadd.f32 0.0, %v654
        %v656 = vpop.f32.mrf.mxu0
        %v657 = vpop.f32.mrf.mxu0
        %v658 = vpop.f32.mrf.mxu0
        %659 = vdwg.mxu0
        %661 = vrot.lane.b32.xlu0 %v655, 8
        %v662 = vpop.permute.xlu0 %661
        %vm664 = vcmask 130112
        %665 = vst.msk [vmem:[#allocation2] sm:$0xff] %vm664, %v662
        %666 = vrot.lane.b32.xlu0 %v431, 112
        %v667 = vpop.permute.xlu0 %666
        %668 = vrot.lane.b32.xlu0 %v431, 80
        %v669 = vpop.permute.xlu0 %668
        %v671 = vsel %vm435, %v667, 0
        %v674 = vsel %vm435, %v669, 0
        %676 = vmatprep.subr.bf16.mxu0 0
        %677 = vmatpush1.bf16.xpose.msra.mxu0 0
        %678 = vmatprep.subr.bf16.mxu0 0
        %679 = vmatpush1.bf16.xpose.msra.mxu0 0
        %680 = vmatprep.subr.bf16.mxu0 0
        %681 = vmatpush1.bf16.xpose.msra.mxu0 0
        %682 = vmatprep.subr.bf16.mxu0 0
        %683 = vmatpush1.bf16.xpose.msra.mxu0 0
        %684 = vmatprep.subr.bf16.mxu0 0
        %685 = vmatpush1.bf16.xpose.msra.mxu0 0
        %686 = vmatprep.subr.bf16.mxu0 0
        %687 = vmatpush1.bf16.xpose.msra.mxu0 0
        %688 = vmatprep.subr.bf16.mxu0 0
        %689 = vmatpush1.bf16.xpose.msra.mxu0 0
        %690 = vmatprep.subr.bf16.mxu0 0
        %691 = vmatpush1.bf16.xpose.msra.mxu0 %v674
        %692 = vmatprep.subr.bf16.mxu0 0
        %693 = vmatpush2.bf16.xpose.msra.mxu0 0
        %694 = vmatprep.subr.bf16.mxu0 0
        %695 = vmatpush2.bf16.xpose.msra.mxu0 0
        %696 = vmatprep.subr.bf16.mxu0 0
        %697 = vmatpush2.bf16.xpose.msra.mxu0 0
        %698 = vmatprep.subr.bf16.mxu0 0
        %699 = vmatpush2.bf16.xpose.msra.mxu0 0
        %700 = vmatprep.subr.bf16.mxu0 0
        %701 = vmatpush2.bf16.xpose.msra.mxu0 0
        %702 = vmatprep.subr.bf16.mxu0 0
        %703 = vmatpush2.bf16.xpose.msra.mxu0 0
        %704 = vmatprep.subr.bf16.mxu0 0
        %705 = vmatpush2.bf16.xpose.msra.mxu0 0
        %706 = vmatprep.subr.bf16.mxu0 0
        %707 = vmatpush2.bf16.xpose.msra.mxu0 0
        %708 = vmatprep.mubr.bf16.mxu0 0
        %709 = vmatmul.mubr.bf16.gmra.mxu0 %v671
        %v710 = vpop.f32.mrf.mxu0
        %v711 = vadd.f32 0.0, %v710
        %v712 = vpop.f32.mrf.mxu0
        %v713 = vpop.f32.mrf.mxu0
        %v714 = vpop.f32.mrf.mxu0
        %715 = vdwg.mxu0
        %v716 = vmul.f32 %v711, 0.35355338
        %v717 = vsel %vm435, %v716, -inf
        %718 = vmax.xlane.f32.xlu0 %v717
        %v719 = vpop.xlane.xlu0 %718
        %v720 = vsub.f32 %v716, %v719
        %v721 = vmul.f32 %v720, 1.442695
        %v722 = vpow.pop %v721
        %v723 = vsel %vm435, %v722, 0.0
        %724 = vadd.xlane.f32.xlu0 %v723
        %v725 = vpop.xlane.xlu0 %724
        %v726 = vrcp.pop %v725
        %v727 = vmul.f32 %v722, %v726
        %v728 = vpack.c.bf16 %v727, %v727
        %s729 = scalar_lea.vmem %s360, 8 [#allocation10]
        %730 = vst.msk [vmem:[%s729] sm:$0xf] %vm495, %v728
        %731 = vrot.lane.b32.xlu0 %v431, 48
        %v732 = vpop.permute.xlu0 %731
        %v734 = vsel %vm435, %v728, 0
        %v737 = vsel %vm502, %v732, 0
        %739 = vmatprep.subr.bf16.mxu0 0
        %740 = vmatpush1.bf16.msra.mxu0 0
        %741 = vmatprep.subr.bf16.mxu0 0
        %742 = vmatpush1.bf16.msra.mxu0 0
        %743 = vmatprep.subr.bf16.mxu0 0
        %744 = vmatpush1.bf16.msra.mxu0 0
        %745 = vmatprep.subr.bf16.mxu0 0
        %746 = vmatpush1.bf16.msra.mxu0 0
        %747 = vmatprep.subr.bf16.mxu0 0
        %748 = vmatpush1.bf16.msra.mxu0 0
        %749 = vmatprep.subr.bf16.mxu0 0
        %750 = vmatpush1.bf16.msra.mxu0 0
        %751 = vmatprep.subr.bf16.mxu0 0
        %752 = vmatpush1.bf16.msra.mxu0 0
        %753 = vmatprep.subr.bf16.mxu0 0
        %754 = vmatpush1.bf16.msra.mxu0 %v737
        %755 = vmatprep.subr.bf16.mxu0 0
        %756 = vmatpush2.bf16.msra.mxu0 0
        %757 = vmatprep.subr.bf16.mxu0 0
        %758 = vmatpush2.bf16.msra.mxu0 0
        %759 = vmatprep.subr.bf16.mxu0 0
        %760 = vmatpush2.bf16.msra.mxu0 0
        %761 = vmatprep.subr.bf16.mxu0 0
        %762 = vmatpush2.bf16.msra.mxu0 0
        %763 = vmatprep.subr.bf16.mxu0 0
        %764 = vmatpush2.bf16.msra.mxu0 0
        %765 = vmatprep.subr.bf16.mxu0 0
        %766 = vmatpush2.bf16.msra.mxu0 0
        %767 = vmatprep.subr.bf16.mxu0 0
        %768 = vmatpush2.bf16.msra.mxu0 0
        %769 = vmatprep.subr.bf16.mxu0 0
        %770 = vmatpush2.bf16.msra.mxu0 0
        %771 = vmatprep.mubr.bf16.mxu0 0
        %772 = vmatmul.mubr.bf16.gmra.mxu0 %v734
        %v773 = vpop.f32.mrf.mxu0
        %v774 = vadd.f32 0.0, %v773
        %v775 = vpop.f32.mrf.mxu0
        %v776 = vpop.f32.mrf.mxu0
        %v777 = vpop.f32.mrf.mxu0
        %778 = vdwg.mxu0
        %780 = vrot.lane.b32.xlu0 %v774, 16
        %v781 = vpop.permute.xlu0 %780
        %vm783 = vcmask 195712
        %784 = vst.msk [vmem:[#allocation2] sm:$0xff] %vm783, %v781
        %785 = vrot.lane.b32.xlu0 %v431, 104
        %v786 = vpop.permute.xlu0 %785
        %787 = vrot.lane.b32.xlu0 %v431, 72
        %v788 = vpop.permute.xlu0 %787
        %v790 = vsel %vm435, %v786, 0
        %v793 = vsel %vm435, %v788, 0
        %795 = vmatprep.subr.bf16.mxu0 0
        %796 = vmatpush1.bf16.xpose.msra.mxu0 0
        %797 = vmatprep.subr.bf16.mxu0 0
        %798 = vmatpush1.bf16.xpose.msra.mxu0 0
        %799 = vmatprep.subr.bf16.mxu0 0
        %800 = vmatpush1.bf16.xpose.msra.mxu0 0
        %801 = vmatprep.subr.bf16.mxu0 0
        %802 = vmatpush1.bf16.xpose.msra.mxu0 0
        %803 = vmatprep.subr.bf16.mxu0 0
        %804 = vmatpush1.bf16.xpose.msra.mxu0 0
        %805 = vmatprep.subr.bf16.mxu0 0
        %806 = vmatpush1.bf16.xpose.msra.mxu0 0
        %807 = vmatprep.subr.bf16.mxu0 0
        %808 = vmatpush1.bf16.xpose.msra.mxu0 0
        %809 = vmatprep.subr.bf16.mxu0 0
        %810 = vmatpush1.bf16.xpose.msra.mxu0 %v793
        %811 = vmatprep.subr.bf16.mxu0 0
        %812 = vmatpush2.bf16.xpose.msra.mxu0 0
        %813 = vmatprep.subr.bf16.mxu0 0
        %814 = vmatpush2.bf16.xpose.msra.mxu0 0
        %815 = vmatprep.subr.bf16.mxu0 0
        %816 = vmatpush2.bf16.xpose.msra.mxu0 0
        %817 = vmatprep.subr.bf16.mxu0 0
        %818 = vmatpush2.bf16.xpose.msra.mxu0 0
        %819 = vmatprep.subr.bf16.mxu0 0
        %820 = vmatpush2.bf16.xpose.msra.mxu0 0
        %821 = vmatprep.subr.bf16.mxu0 0
        %822 = vmatpush2.bf16.xpose.msra.mxu0 0
        %823 = vmatprep.subr.bf16.mxu0 0
        %824 = vmatpush2.bf16.xpose.msra.mxu0 0
        %825 = vmatprep.subr.bf16.mxu0 0
        %826 = vmatpush2.bf16.xpose.msra.mxu0 0
        %827 = vmatprep.mubr.bf16.mxu0 0
        %828 = vmatmul.mubr.bf16.gmra.mxu0 %v790
        %v829 = vpop.f32.mrf.mxu0
        %v830 = vadd.f32 0.0, %v829
        %v831 = vpop.f32.mrf.mxu0
        %v832 = vpop.f32.mrf.mxu0
        %v833 = vpop.f32.mrf.mxu0
        %834 = vdwg.mxu0
        %v835 = vmul.f32 %v830, 0.35355338
        %v836 = vsel %vm435, %v835, -inf
        %837 = vmax.xlane.f32.xlu0 %v836
        %v838 = vpop.xlane.xlu0 %837
        %v839 = vsub.f32 %v835, %v838
        %v840 = vmul.f32 %v839, 1.442695
        %v841 = vpow.pop %v840
        %v842 = vsel %vm435, %v841, 0.0
        %843 = vadd.xlane.f32.xlu0 %v842
        %v844 = vpop.xlane.xlu0 %843
        %v845 = vrcp.pop %v844
        %v846 = vmul.f32 %v841, %v845
        %v847 = vpack.c.bf16 %v846, %v846
        %s848 = scalar_lea.vmem %s360, 12 [#allocation10]
        %849 = vst.msk [vmem:[%s848] sm:$0xf] %vm495, %v847
        %850 = vrot.lane.b32.xlu0 %v431, 40
        %v851 = vpop.permute.xlu0 %850
        %v853 = vsel %vm435, %v847, 0
        %v856 = vsel %vm502, %v851, 0
        %858 = vmatprep.subr.bf16.mxu0 0
        %859 = vmatpush1.bf16.msra.mxu0 0
        %860 = vmatprep.subr.bf16.mxu0 0
        %861 = vmatpush1.bf16.msra.mxu0 0
        %862 = vmatprep.subr.bf16.mxu0 0
        %863 = vmatpush1.bf16.msra.mxu0 0
        %864 = vmatprep.subr.bf16.mxu0 0
        %865 = vmatpush1.bf16.msra.mxu0 0
        %866 = vmatprep.subr.bf16.mxu0 0
        %867 = vmatpush1.bf16.msra.mxu0 0
        %868 = vmatprep.subr.bf16.mxu0 0
        %869 = vmatpush1.bf16.msra.mxu0 0
        %870 = vmatprep.subr.bf16.mxu0 0
        %871 = vmatpush1.bf16.msra.mxu0 0
        %872 = vmatprep.subr.bf16.mxu0 0
        %873 = vmatpush1.bf16.msra.mxu0 %v856
        %874 = vmatprep.subr.bf16.mxu0 0
        %875 = vmatpush2.bf16.msra.mxu0 0
        %876 = vmatprep.subr.bf16.mxu0 0
        %877 = vmatpush2.bf16.msra.mxu0 0
        %878 = vmatprep.subr.bf16.mxu0 0
        %879 = vmatpush2.bf16.msra.mxu0 0
        %880 = vmatprep.subr.bf16.mxu0 0
        %881 = vmatpush2.bf16.msra.mxu0 0
        %882 = vmatprep.subr.bf16.mxu0 0
        %883 = vmatpush2.bf16.msra.mxu0 0
        %884 = vmatprep.subr.bf16.mxu0 0
        %885 = vmatpush2.bf16.msra.mxu0 0
        %886 = vmatprep.subr.bf16.mxu0 0
        %887 = vmatpush2.bf16.msra.mxu0 0
        %888 = vmatprep.subr.bf16.mxu0 0
        %889 = vmatpush2.bf16.msra.mxu0 0
        %890 = vmatprep.mubr.bf16.mxu0 0
        %891 = vmatmul.mubr.bf16.gmra.mxu0 %v853
        %v892 = vpop.f32.mrf.mxu0
        %v893 = vadd.f32 0.0, %v892
        %v894 = vpop.f32.mrf.mxu0
        %v895 = vpop.f32.mrf.mxu0
        %v896 = vpop.f32.mrf.mxu0
        %897 = vdwg.mxu0
        %899 = vrot.lane.b32.xlu0 %v893, 24
        %v900 = vpop.permute.xlu0 %899
        %vm902 = vcmask 261312
        %903 = vst.msk [vmem:[#allocation2] sm:$0xff] %vm902, %v900
        %v904 = vld [vmem:[#allocation2] sm:$0xff]
        %v905 = vpack.c.bf16 %v904, %v904
        %v906 = vld [vmem:[#allocation8] sm:$0xf]
        %v907 = vld [vmem:[#allocation8 + $0x4] sm:$0xf]
        %v908 = vld [vmem:[#allocation8 + $0x8] sm:$0xf]
        %v909 = vld [vmem:[#allocation8 + $0xc] sm:$0xf]
        %v910 = vld [vmem:[%s4] sm:$0x1]
        %v912 = vlaneseq
        %v913 = vshrl.u32 %v912, 7
        %v914 = vsub.s32 0, %v913
        %v915 = vrot.slane %v910, %v914
        %v921 = vunpack.c.l.b16 %v906
        %v922 = vunpack.c.l.b16 %v907
        %v923 = vunpack.c.l.b16 %v908
        %v924 = vunpack.c.l.b16 %v909
        %v925 = vpack.c.b16 %v922, %v921
        %v926 = vpack.c.b16 %v924, %v923
        %v930 = vsel %vm387, %v905, 0
        %932 = vmatprep.subr.bf16.mxu0 0
        %933 = vmatpush1.bf16.msra.mxu0 0
        %934 = vmatprep.subr.bf16.mxu0 0
        %935 = vmatpush1.bf16.msra.mxu0 0
        %936 = vmatprep.subr.bf16.mxu0 0
        %937 = vmatpush1.bf16.msra.mxu0 0
        %938 = vmatprep.subr.bf16.mxu0 0
        %939 = vmatpush1.bf16.msra.mxu0 0
        %940 = vmatprep.subr.bf16.mxu0 0
        %941 = vmatpush1.bf16.msra.mxu0 0
        %942 = vmatprep.subr.bf16.mxu0 0
        %943 = vmatpush1.bf16.msra.mxu0 0
        %944 = vmatprep.subr.bf16.mxu0 0
        %945 = vmatpush1.bf16.msra.mxu0 %v926
        %946 = vmatprep.subr.bf16.mxu0 0
        %947 = vmatpush1.bf16.msra.mxu0 %v925
        %948 = vmatprep.subr.bf16.mxu0 0
        %949 = vmatpush2.bf16.msra.mxu0 0
        %950 = vmatprep.subr.bf16.mxu0 0
        %951 = vmatpush2.bf16.msra.mxu0 0
        %952 = vmatprep.subr.bf16.mxu0 0
        %953 = vmatpush2.bf16.msra.mxu0 0
        %954 = vmatprep.subr.bf16.mxu0 0
        %955 = vmatpush2.bf16.msra.mxu0 0
        %956 = vmatprep.subr.bf16.mxu0 0
        %957 = vmatpush2.bf16.msra.mxu0 0
        %958 = vmatprep.subr.bf16.mxu0 0
        %959 = vmatpush2.bf16.msra.mxu0 0
        %960 = vmatprep.subr.bf16.mxu0 0
        %961 = vmatpush2.bf16.msra.mxu0 0
        %962 = vmatprep.subr.bf16.mxu0 0
        %963 = vmatpush2.bf16.msra.mxu0 0
        %964 = vmatprep.mubr.bf16.mxu0 0
        %965 = vmatmul.mubr.bf16.gmra.mxu0 %v930
        %v966 = vpop.f32.mrf.mxu0
        %v967 = vadd.f32 %v915, %v966
        %v968 = vpop.f32.mrf.mxu0
        %v969 = vpop.f32.mrf.mxu0
        %v970 = vpop.f32.mrf.mxu0
        %971 = vdwg.mxu0
        %v972 = vadd.f32 %v362, %v967
        %v973 = vsel %vm387, %v972, 0.0
        %974 = vadd.xlane.f32.xlu0 %v973
        %v975 = vpop.xlane.xlu0 %974
        %v976 = vrcp.pop 32.0
        %v977 = vmul.f32 %v975, %v976
        %v978 = vsub.f32 %v972, %v977
        %v979 = vmul.f32 %v978, %v978
        %v980 = vsel %vm387, %v979, 0.0
        %981 = vadd.xlane.f32.xlu0 %v980
        %v982 = vpop.xlane.xlu0 %981
        %v983 = vmul.f32 %v982, %v976
        %v984 = vadd.f32 %v983, 1e-05
        %v985 = vrsqrt.pop %v984
        %v986 = vmul.f32 %v978, %v985
        %v987 = vld [vmem:[%s5] sm:$0x1]
        %v989 = vlaneseq
        %v990 = vshrl.u32 %v989, 7
        %v991 = vsub.s32 0, %v990
        %v992 = vrot.slane %v987, %v991
        %v994 = vmul.f32 %v986, %v992
        %v995 = vld [vmem:[%s6] sm:$0x1]
        %v997 = vlaneseq
        %v998 = vshrl.u32 %v997, 7
        %v999 = vsub.s32 0, %v998
        %v1000 = vrot.slane %v995, %v999
        %v1002 = vadd.f32 %v994, %v1000
        %1003 = vst.msk [vmem:[%s353] sm:$0xff] %vm387, %v1002
        %s1004 = sand.u32 %s190, 1
        %s1005 = scalar_lea.sflag [#allocation5], %s1004
        %s1006 = sand.u32 %s190, 1
        %s1007 = smul.addr %s1006, 8
        %s1008 = scalar_lea.vmem [#allocation9], %s1007
        %s1009 = sand.u32 %s216, 1
        %s1010 = scalar_lea.sflag [#allocation11], %s1009
        %s1011 = sand.u32 %s216, 1
        %s1012 = smul.addr %s1011, 16
        %s1013 = scalar_lea.vmem [#allocation10], %s1012
        // Predicated region
        $region61: #{tpu_custom_call.1} parent=47 // pred_check
          %p1014 = pneg %p200
        $region62: #{tpu_custom_call.1} parent=47 // pred_check_branch
          %1016 = sbr.rel (%p1014) target = $region64
        $region63: #{tpu_custom_call.1} parent=47 // pred_region
          %s1018 = ssub.s32 128, 128
          %1019 = vsyncadd %s1005, %s1018
          %s1020 = smul.addr %s30, 128
          %s1021 = scalar_lea.hbm %s7, %s1020
          %s1023 = sshll.u32 %s1008, 4
          %s1024 = int_to_ptr.vmem [resolvable:$true] %s1023
          %1026 = dma.vmem_to_hbm [thread:$0]  %s1024, 128, %s1021, %s1005
        $region64: #{tpu_custom_call.1} parent=47 // pred_fallthru
          _
        // Predicated region
        $region65: #{tpu_custom_call.1} parent=47 // pred_check
          %p1027 = pneg %p226
        $region66: #{tpu_custom_call.1} parent=47 // pred_check_branch
          %1029 = sbr.rel (%p1027) target = $region68
        $region67: #{tpu_custom_call.1} parent=47 // pred_region
          %s1031 = ssub.s32 256, 256
          %1032 = vsyncadd %s1010, %s1031
          %s1033 = smul.addr %s30, 4
          %s1034 = smul.addr %s1033, 64
          %s1035 = scalar_lea.hbm %s8, %s1034
          %s1036 = sshll.u32 %s1013, 4
          %s1037 = int_to_ptr.vmem [resolvable:$true] %s1036
          %1042 = dma.vmem_to_hbm [thread:$0]  %s1037, 256, %s1035, %s1010, 64, 64, 4
        $region68: #{tpu_custom_call.1} parent=47 // pred_fallthru
          _
      $region48: #{tpu_custom_call.1} parent=5 // pred_fallthru
        _
      %p1043 = scmp.le.s32.totalorder 2, %s25
      // Predicated region
      $region69: #{tpu_custom_call.1} parent=5 // pred_check
        %p1044 = pneg %p1043
      $region70: #{tpu_custom_call.1} parent=5 // pred_check_branch
        %1046 = sbr.rel (%p1044) target = $region72
      $region71: #{tpu_custom_call.1} parent=5 // pred_region
        %s1047 = ssub.s32 %s25, 2
        // Predicated region
        $region73: #{tpu_custom_call.1} parent=71 // pred_check
          %p1048 = pneg %p206
        $region74: #{tpu_custom_call.1} parent=71 // pred_check_branch
          %1050 = sbr.rel (%p1048) target = $region76
        $region75: #{tpu_custom_call.1} parent=71 // pred_region
          %s1051 = sand.u32 %s191, 1
          %s1052 = scalar_lea.sflag [#allocation5], %s1051
          %s1053 = sand.u32 %s191, 1
          %s1054 = smul.addr %s1053, 8
          %s1055 = scalar_lea.vmem [#allocation9], %s1054
          %1056 = dma.done %s1052, 128
        $region76: #{tpu_custom_call.1} parent=71 // pred_fallthru
          _
        // Predicated region
        $region77: #{tpu_custom_call.1} parent=71 // pred_check
          %p1057 = pneg %p232
        $region78: #{tpu_custom_call.1} parent=71 // pred_check_branch
          %1059 = sbr.rel (%p1057) target = $region80
        $region79: #{tpu_custom_call.1} parent=71 // pred_region
          %s1060 = sand.u32 %s217, 1
          %s1061 = scalar_lea.sflag [#allocation11], %s1060
          %s1062 = sand.u32 %s217, 1
          %s1063 = smul.addr %s1062, 16
          %s1064 = scalar_lea.vmem [#allocation10], %s1063
          %1065 = dma.done %s1061, 256
        $region80: #{tpu_custom_call.1} parent=71 // pred_fallthru
          _
      $region72: #{tpu_custom_call.1} parent=5 // pred_fallthru
        _
    $region6: #{tpu_custom_call.1} parent=1 // loop_footer
      %s29 = sadd.s32 1, %s25
    $region7: #{tpu_custom_call.1} parent=1 // loop_footer_branch
      %24 = sbr.rel target = $region3
    $region8: #{tpu_custom_call.1} parent=1 // loop_exit
      _
    %1066 = vsyncpa [#allocation4], 1
    %s1067 = scalar_lea.sflag [#allocation4], 1
    %1068 = vsyncpa %s1067, 1
    %1069 = vsyncpa [#allocation7], 1
    %1070 = vsyncpa [#allocation5], 1
    %s1071 = scalar_lea.sflag [#allocation5], 1
    %1072 = vsyncpa %s1071, 1
    %1073 = vsyncpa [#allocation11], 1
    %s1074 = scalar_lea.sflag [#allocation11], 1
    %1075 = vsyncpa %s1074, 1

</llo_original>
